<compile_context>
chip_gen: v6e
topology: v6e:2x2x1
jax: 0.10.0
libtpu: 0.0.40
codegen_flags: <defaults>
</compile_context>

<pallas_src>
import functools

import jax
import jax.numpy as jnp
from jax import lax
from jax.experimental import pallas as pl
from jax.experimental.pallas import tpu as pltpu

_PADL = 128  # lane-aligned halo width of the flat zero strips (multiple of 128)


# ----------------------------- in-kernel helpers ---------------------------- #

def _im2col_to_scratch(strip_ref, taps_ref, length, W, masks):
    """Write the 9 shifted/masked taps of a 3x3 same-pad conv (channel-major,
    spatially flattened layout) into a preallocated VMEM taps buffer.

    strip_ref: (C, length + 2*_PADL) bf16; activation at lanes
               [_PADL, _PADL+length), halo lanes hold zeros.
    taps_ref:  (9*C, length) bf16 scratch; tap t=(dh+1)*3+(dw+1) occupies rows
               [t*C, (t+1)*C)  -- matches an OIHW weight laid out (O,kh,kw,I).
    masks:     (not_left, not_right, not_top, not_bot), each (1, length) bool,
               per flattened position *within its own image* (so a lane-
               concatenated [rgb | depth] strip is handled correctly too).
    """
    not_left, not_right, not_top, not_bot = masks
    xp = strip_ref[...]                         # (C, length + 2*_PADL)
    C = xp.shape[0]
    t = 0
    for dh in (-1, 0, 1):
        for dw in (-1, 0, 1):
            off = dh * W + dw
            sh = xp[:, _PADL + off:_PADL + off + length]
            m = None
            if dh == -1:
                m = not_top
            elif dh == 1:
                m = not_bot
            if dw == -1:
                m = not_left if m is None else (m & not_left)
            elif dw == 1:
                m = not_right if m is None else (m & not_right)
            if m is not None:
                sh = jnp.where(m, sh, jnp.zeros_like(sh))
            # C is a multiple of 8 -> tile-aligned sublane store, no concat.
            taps_ref[t * C:(t + 1) * C, :] = sh
            t += 1


def _fused_rcnn_kernel(img_ref, dep_ref,
                       bbw_ref, bbb_ref,
                       rpnw_ref, rpnb_ref,
                       hdw_ref, hdb_ref,
                       feat_ref, obj_ref, box_ref,
                       bb_strip, bb_taps, rpn_strip, rpn_taps,
                       *, H, W, num_anchors):
    """One batch element: backbone([rgb|depth]) -> concat -> RPN -> 1x1 heads.

    Layout: every activation is (C, flattened spatial); the lane (last) dim is
    spatial and lane-dense. rgb and depth are lane-concatenated so the shared
    backbone weight is contracted in a single MXU matmul.
    """
    HW = H * W
    L = 2 * HW                           # [rgb | depth] lane-concatenated
    Cp = img_ref.shape[0]                # padded input channels (multiple of 8)
    Cb = bbw_ref.shape[0]                # backbone out channels
    C2 = rpnw_ref.shape[0]               # 2 * Cb
    A = num_anchors

    # validity masks from an in-kernel iota (H, W are powers of two).
    q = lax.broadcasted_iota(jnp.int32, (1, L), 1)
    col = q & (W - 1)                    # column within the image
    pos = q & (HW - 1)                   # flat position within the image
    not_left = col >= 1
    not_right = col <= W - 2
    not_top = pos >= W
    not_bot = pos < HW - W
    masks2 = (not_left, not_right, not_top, not_bot)            # length 2*HW
    masks1 = tuple(mk[:, :HW] for mk in masks2)                 # length HW

    # ---- backbone: one shared-weight matmul over [rgb | depth] lanes -------
    zb = jnp.zeros((Cp, _PADL), jnp.bfloat16)
    bb_strip[:, :_PADL] = zb                                     # left halo
    bb_strip[:, _PADL + L:] = zb                                 # right halo
    bb_strip[:, _PADL:_PADL + HW] = img_ref[...].astype(jnp.bfloat16)
    bb_strip[:, _PADL + HW:_PADL + L] = dep_ref[...].astype(jnp.bfloat16)
    _im2col_to_scratch(bb_strip, bb_taps, L, W, masks2)          # (9*Cp, 2*HW)

    bb = jnp.dot(bbw_ref[...], bb_taps[...],
                 preferred_element_type=jnp.float32)             # (Cb, 2*HW)
    bb = jnp.maximum(bb + bbb_ref[...], 0.0).astype(jnp.bfloat16)

    # ---- torch.cat((rgb_feat, depth_feat), dim=1): fill the RPN strip ------
    zr = jnp.zeros((C2, _PADL), jnp.bfloat16)
    rpn_strip[:, :_PADL] = zr
    rpn_strip[:, _PADL + HW:] = zr
    rpn_strip[:Cb, _PADL:_PADL + HW] = bb[:, :HW]                # rgb features
    rpn_strip[Cb:, _PADL:_PADL + HW] = bb[:, HW:]                # depth features
    feat_ref[...] = rpn_strip[:, _PADL:_PADL + HW]               # bf16 output

    # ---- RPN head: 3x3 conv + ReLU -----------------------------------------
    _im2col_to_scratch(rpn_strip, rpn_taps, HW, W, masks1)       # (9*C2, HW)
    rpn_act = jnp.dot(rpnw_ref[...], rpn_taps[...],
                      preferred_element_type=jnp.float32)        # (C2, HW)
    rpn_act = jnp.maximum(rpn_act + rpnb_ref[...], 0.0)

    # ---- fused 1x1 heads: objectness (A) and bbox deltas (4A) --------------
    head = jnp.dot(hdw_ref[...], rpn_act.astype(jnp.bfloat16),
                   preferred_element_type=jnp.float32) + hdb_ref[...]
    obj_ref[...] = head[:A, :].astype(obj_ref.dtype)
    box_ref[...] = head[A:, :].astype(box_ref.dtype)


# ------------------------------ parameters ---------------------------------- #

def init_params(key, in_ch=3, backbone_out=8, num_anchors=3):
    """PyTorch-style OIHW f32 conv weights, as the original module would hold."""
    ks = jax.random.split(key, 8)
    s = 0.05
    c2 = 2 * backbone_out
    return {
        "bb_w": s * jax.random.normal(ks[0], (backbone_out, in_ch, 3, 3), jnp.float32),
        "bb_b": s * jax.random.normal(ks[1], (backbone_out,), jnp.float32),
        "rpn_w": s * jax.random.normal(ks[2], (c2, c2, 3, 3), jnp.float32),
        "rpn_b": s * jax.random.normal(ks[3], (c2,), jnp.float32),
        "cls_w": s * jax.random.normal(ks[4], (num_anchors, c2, 1, 1), jnp.float32),
        "cls_b": s * jax.random.normal(ks[5], (num_anchors,), jnp.float32),
        "box_w": s * jax.random.normal(ks[6], (4 * num_anchors, c2, 1, 1), jnp.float32),
        "box_b": s * jax.random.normal(ks[7], (4 * num_anchors,), jnp.float32),
    }


def _conv3x3_to_im2col(w_oihw, cin_pad):
    """(Cout, Cin, 3, 3) -> (Cout, 9*cin_pad); tap (kh,kw) row-major then cin,
    with the input-channel dim zero-padded to `cin_pad` (sublane-tile aligned)."""
    cout, cin = w_oihw.shape[0], w_oihw.shape[1]
    if cin_pad > cin:
        w_oihw = jnp.pad(w_oihw, ((0, 0), (0, cin_pad - cin), (0, 0), (0, 0)))
    return jnp.transpose(w_oihw, (0, 2, 3, 1)).reshape(cout, 9 * cin_pad)


def prepare_params(params):
    """One-time conversion to the fused-kernel layout: bf16 matmul operands,
    f32 biases as (C, 1) columns, the two 1x1 heads concatenated, and the
    backbone input-channel dim padded to a sublane tile (8, NOT 16: keeps the
    backbone contraction K = 72 <= 128 for a single pass on v5e)."""
    cin = params["bb_w"].shape[1]
    cb = params["bb_w"].shape[0]
    c2 = 2 * cb
    na = params["cls_w"].shape[0]
    cin_pad = -(-cin // 8) * 8
    head_w = jnp.concatenate(
        [params["cls_w"][:, :, 0, 0], params["box_w"][:, :, 0, 0]], axis=0)
    head_b = jnp.concatenate([params["cls_b"], params["box_b"]], axis=0)
    return {
        "bb_w2": _conv3x3_to_im2col(params["bb_w"], cin_pad).astype(jnp.bfloat16),
        "bb_b2": params["bb_b"].reshape(-1, 1),
        "rpn_w2": _conv3x3_to_im2col(params["rpn_w"], c2).astype(jnp.bfloat16),
        "rpn_b2": params["rpn_b"].reshape(-1, 1),
        "head_w": head_w.astype(jnp.bfloat16),
        "head_b": head_b.reshape(-1, 1),
        "in_ch": cin,
        "cin_pad": cin_pad,
        "backbone_out": cb,
        "num_anchors": na,
    }


# ----------------------- GeneralizedRCNN forward ----------------------------- #

def generalized_rcnn_forward(kparams, images_nchw, depths_nchw):
    """Inference forward for the RGB_ON and DEPTH_ON configuration,
    roi_heads-is-None branch: returns concatenated backbone features plus the
    RPN head maps (objectness / bbox deltas), all in NCHW.

    images_coarse / depth_coarse only feed roi_heads and are dead here, so
    they are not computed (saves two full-image resizes).
    """
    N, Cin, H, W = images_nchw.shape
    assert depths_nchw.shape == images_nchw.shape
    assert Cin == kparams["in_ch"]
    # power-of-two H, W keep the in-kernel row/col masks to cheap bit-ops.
    assert (H & (H - 1)) == 0 and (W & (W - 1)) == 0, "H and W must be powers of 2"
    HW = H * W
    cp = kparams["cin_pad"]
    cb = kparams["backbone_out"]
    c2 = 2 * cb
    na = kparams["num_anchors"]

    # channel-major + flattened spatial: NCHW -> (N, C, H*W) is a pure reshape
    # (no transpose); lane dim is spatial -> lane-dense loads/stores. Inputs
    # stay f32 (bf16 cast happens in-kernel); channels are zero-padded to a
    # sublane tile so every im2col tap block is tile aligned.
    img = images_nchw.reshape(N, Cin, HW)
    dep = depths_nchw.reshape(N, Cin, HW)
    if cp > Cin:
        img = jnp.concatenate(
            [img, jnp.zeros((N, cp - Cin, HW), images_nchw.dtype)], axis=1)
        dep = jnp.concatenate(
            [dep, jnp.zeros((N, cp - Cin, HW), depths_nchw.dtype)], axis=1)

    kern = functools.partial(_fused_rcnn_kernel, H=H, W=W, num_anchors=na)

    def batch3(c):
        return pl.BlockSpec((pl.Squeezed(), c, HW), lambda n: (n, 0, 0))

    def full2(a, b):
        return pl.BlockSpec((a, b), lambda n: (0, 0))

    feat, obj, box = pl.pallas_call(
        kern,
        out_shape=(
            jax.ShapeDtypeStruct((N, c2, HW), jnp.bfloat16),     # features (bf16)
            jax.ShapeDtypeStruct((N, na, HW), jnp.float32),      # objectness
            jax.ShapeDtypeStruct((N, 4 * na, HW), jnp.float32),  # bbox deltas
        ),
        grid=(N,),
        in_specs=[
            batch3(cp),                   # rgb image (f32, channel-padded)
            batch3(cp),                   # depth image (f32, channel-padded)
            full2(cb, 9 * cp),            # backbone im2col weight (bf16)
            full2(cb, 1),                 # backbone bias (f32)
            full2(c2, 9 * c2),            # rpn conv im2col weight (bf16)
            full2(c2, 1),                 # rpn conv bias (f32)
            full2(5 * na, c2),            # fused heads weight (bf16)
            full2(5 * na, 1),             # fused heads bias (f32)
        ],
        out_specs=(batch3(c2), batch3(na), batch3(4 * na)),
        scratch_shapes=[
            pltpu.VMEM((cp, 2 * HW + 2 * _PADL), jnp.bfloat16),   # backbone strip
            pltpu.VMEM((9 * cp, 2 * HW), jnp.bfloat16),           # backbone taps
            pltpu.VMEM((c2, HW + 2 * _PADL), jnp.bfloat16),       # rpn strip
            pltpu.VMEM((9 * c2, HW), jnp.bfloat16),               # rpn taps
        ],
        compiler_params=pltpu.CompilerParams(
            dimension_semantics=("parallel",)),
    )(img, dep,
      kparams["bb_w2"], kparams["bb_b2"],
      kparams["rpn_w2"], kparams["rpn_b2"],
      kparams["head_w"], kparams["head_b"])

    # channel-major flattened layout IS NCHW up to a reshape: no transposes.
    return {
        "features": feat.reshape(N, c2, H, W),
        "objectness": obj.reshape(N, na, H, W),
        "bbox_deltas": box.reshape(N, 4 * na, H, W),
    }


# ------------------------------ reference ----------------------------------- #

def _reference_forward(params, images, depths):
    """Pure-JAX (f32) reference of the same forward pass for validation."""
    dn = ("NCHW", "OIHW", "NCHW")

    def conv(x, w, b):
        y = lax.conv_general_dilated(x, w, window_strides=(1, 1),
                                     padding="SAME", dimension_numbers=dn)
        return y + b.reshape(1, -1, 1, 1)

    rgb = jax.nn.relu(conv(images, params["bb_w"], params["bb_b"]))
    dpt = jax.nn.relu(conv(depths, params["bb_w"], params["bb_b"]))
    feats = jnp.concatenate([rgb, dpt], axis=1)
    t = jax.nn.relu(conv(feats, params["rpn_w"], params["rpn_b"]))
    obj = conv(t, params["cls_w"], params["cls_b"])
    box = conv(t, params["box_w"], params["box_b"])
    return feats, obj, box


def _relerr(a, b):
    a = jnp.asarray(a, jnp.float32)
    b = jnp.asarray(b, jnp.float32)
    return float(jnp.max(jnp.abs(a - b)) / (jnp.max(jnp.abs(b)) + 1e-6))


if __name__ == "__main__":
    key = jax.random.PRNGKey(0)
    k_img, k_dep, k_par = jax.random.split(key, 3)

    # small shapes: batch=2, 3-ch rgb + 3-ch depth (shared backbone), 16x16
    images = jax.random.normal(k_img, (2, 3, 16, 16), jnp.float32)   # NCHW
    depths = jax.random.normal(k_dep, (2, 3, 16, 16), jnp.float32)   # NCHW

    params = init_params(k_par, in_ch=3, backbone_out=8, num_anchors=3)
    kparams = prepare_params(params)

    out = generalized_rcnn_forward(kparams, images, depths)
    jax.block_until_ready(out)

    N, _, H, W = images.shape
    c2 = 2 * kparams["backbone_out"]
    na = kparams["num_anchors"]
    assert out["features"].shape == (N, c2, H, W)
    assert out["objectness"].shape == (N, na, H, W)
    assert out["bbox_deltas"].shape == (N, 4 * na, H, W)

    # numeric check vs. pure-JAX f32 reference (kernel uses bf16 MXU operands
    # and bf16 feature storage -> loose tolerance, normalized by max |ref|).
    feats_r, obj_r, box_r = _reference_forward(params, images, depths)
    assert _relerr(out["features"], feats_r) < 5e-2
    assert _relerr(out["objectness"], obj_r) < 5e-2
    assert _relerr(out["bbox_deltas"], box_r) < 5e-2

    print("KERNEL_OK")
</pallas_src>

<mosaic_0001>
module attributes {stable_mosaic.version = 11 : i64} {
  func.func @_fused_rcnn_kernel(%arg0: i32, %arg1: memref<1x8x256xf32, #tpu.memory_space<vmem>>, %arg2: memref<1x8x256xf32, #tpu.memory_space<vmem>>, %arg3: memref<8x72xbf16, #tpu.memory_space<vmem>>, %arg4: memref<8x1xf32, #tpu.memory_space<vmem>>, %arg5: memref<16x144xbf16, #tpu.memory_space<vmem>>, %arg6: memref<16x1xf32, #tpu.memory_space<vmem>>, %arg7: memref<15x16xbf16, #tpu.memory_space<vmem>>, %arg8: memref<15x1xf32, #tpu.memory_space<vmem>>, %arg9: memref<1x16x256xbf16, #tpu.memory_space<vmem>>, %arg10: memref<1x3x256xf32, #tpu.memory_space<vmem>>, %arg11: memref<1x12x256xf32, #tpu.memory_space<vmem>>, %arg12: memref<8x768xbf16, #tpu.memory_space<vmem>>, %arg13: memref<72x512xbf16, #tpu.memory_space<vmem>>, %arg14: memref<16x512xbf16, #tpu.memory_space<vmem>>, %arg15: memref<144x256xbf16, #tpu.memory_space<vmem>>) attributes {dimension_semantics = [#tpu.dimension_semantics<parallel>], iteration_bounds = array<i64: 2>, scalar_prefetch = 0 : i64, scratch_operands = 4 : i64, tpu.core_type = #tpu.core_type<tc>, window_params = [{transform_indices = @transform_0, window_bounds = array<i64: 1, 8, 256>}, {transform_indices = @transform_1, window_bounds = array<i64: 1, 8, 256>}, {pipeline_mode = #tpu.pipeline_mode<synchronous>, transform_indices = @transform_2, window_bounds = array<i64: 8, 72>}, {pipeline_mode = #tpu.pipeline_mode<synchronous>, transform_indices = @transform_3, window_bounds = array<i64: 8, 1>}, {pipeline_mode = #tpu.pipeline_mode<synchronous>, transform_indices = @transform_4, window_bounds = array<i64: 16, 144>}, {pipeline_mode = #tpu.pipeline_mode<synchronous>, transform_indices = @transform_5, window_bounds = array<i64: 16, 1>}, {pipeline_mode = #tpu.pipeline_mode<synchronous>, transform_indices = @transform_6, window_bounds = array<i64: 15, 16>}, {pipeline_mode = #tpu.pipeline_mode<synchronous>, transform_indices = @transform_7, window_bounds = array<i64: 15, 1>}, {transform_indices = @transform_8, window_bounds = array<i64: 1, 16, 256>}, {transform_indices = @transform_9, window_bounds = array<i64: 1, 3, 256>}, {transform_indices = @transform_10, window_bounds = array<i64: 1, 12, 256>}]} {
    %0 = tpu.iota {dimensions = array<i32: 1>} : vector<1x512xi32>
    %c15_i32 = arith.constant 15 : i32
    %1 = vector.broadcast %c15_i32 : i32 to vector<1x512xi32>
    %2 = arith.andi %0, %1 : vector<1x512xi32>
    %c255_i32 = arith.constant 255 : i32
    %3 = vector.broadcast %c255_i32 : i32 to vector<1x512xi32>
    %4 = arith.andi %0, %3 : vector<1x512xi32>
    %c1_i32 = arith.constant 1 : i32
    %5 = vector.broadcast %c1_i32 : i32 to vector<1x512xi32>
    %6 = arith.cmpi sge, %2, %5 : vector<1x512xi32>
    %c14_i32 = arith.constant 14 : i32
    %7 = vector.broadcast %c14_i32 : i32 to vector<1x512xi32>
    %8 = arith.cmpi sle, %2, %7 : vector<1x512xi32>
    %c16_i32 = arith.constant 16 : i32
    %9 = vector.broadcast %c16_i32 : i32 to vector<1x512xi32>
    %10 = arith.cmpi sge, %4, %9 : vector<1x512xi32>
    %c240_i32 = arith.constant 240 : i32
    %11 = vector.broadcast %c240_i32 : i32 to vector<1x512xi32>
    %12 = arith.cmpi slt, %4, %11 : vector<1x512xi32>
    %13 = vector.extract_strided_slice %6 {offsets = [0, 0], sizes = [1, 256], strides = [1, 1]} : vector<1x512xi1> to vector<1x256xi1>
    %14 = vector.extract_strided_slice %8 {offsets = [0, 0], sizes = [1, 256], strides = [1, 1]} : vector<1x512xi1> to vector<1x256xi1>
    %15 = vector.extract_strided_slice %10 {offsets = [0, 0], sizes = [1, 256], strides = [1, 1]} : vector<1x512xi1> to vector<1x256xi1>
    %16 = vector.extract_strided_slice %12 {offsets = [0, 0], sizes = [1, 256], strides = [1, 1]} : vector<1x512xi1> to vector<1x256xi1>
    %cst = arith.constant 0.000000e+00 : bf16
    %17 = vector.broadcast %cst : bf16 to vector<8x128xbf16>
    %c0 = arith.constant 0 : index
    %c0_0 = arith.constant 0 : index
    %18 = vector.load %arg12[%c0, %c0_0] : memref<8x768xbf16, #tpu.memory_space<vmem>>, vector<8x128xbf16>
    tpu.vector_store %arg12[%c0, %c0_0], %17 {strides = array<i32>} : memref<8x768xbf16, #tpu.memory_space<vmem>>, vector<8x128xbf16>,
    %c0_1 = arith.constant 0 : index
    %c640 = arith.constant 640 : index
    %19 = vector.load %arg12[%c0_1, %c640] : memref<8x768xbf16, #tpu.memory_space<vmem>>, vector<8x128xbf16>
    tpu.vector_store %arg12[%c0_1, %c640], %17 {strides = array<i32>} : memref<8x768xbf16, #tpu.memory_space<vmem>>, vector<8x128xbf16>,
    %c0_2 = arith.constant 0 : index
    %c0_3 = arith.constant 0 : index
    %c0_4 = arith.constant 0 : index
    %20 = vector.load %arg1[%c0_2, %c0_3, %c0_4] : memref<1x8x256xf32, #tpu.memory_space<vmem>>, vector<1x8x256xf32>
    %21 = vector.shape_cast %20 : vector<1x8x256xf32> to vector<8x256xf32>
    %22 = arith.truncf %21 : vector<8x256xf32> to vector<8x256xbf16>
    %c0_5 = arith.constant 0 : index
    %c128 = arith.constant 128 : index
    %23 = vector.load %arg12[%c0_5, %c128] : memref<8x768xbf16, #tpu.memory_space<vmem>>, vector<8x256xbf16>
    tpu.vector_store %arg12[%c0_5, %c128], %22 {strides = array<i32>} : memref<8x768xbf16, #tpu.memory_space<vmem>>, vector<8x256xbf16>,
    %c0_6 = arith.constant 0 : index
    %c0_7 = arith.constant 0 : index
    %c0_8 = arith.constant 0 : index
    %24 = vector.load %arg2[%c0_6, %c0_7, %c0_8] : memref<1x8x256xf32, #tpu.memory_space<vmem>>, vector<1x8x256xf32>
    %25 = vector.shape_cast %24 : vector<1x8x256xf32> to vector<8x256xf32>
    %26 = arith.truncf %25 : vector<8x256xf32> to vector<8x256xbf16>
    %c0_9 = arith.constant 0 : index
    %c384 = arith.constant 384 : index
    %27 = vector.load %arg12[%c0_9, %c384] : memref<8x768xbf16, #tpu.memory_space<vmem>>, vector<8x256xbf16>
    tpu.vector_store %arg12[%c0_9, %c384], %26 {strides = array<i32>} : memref<8x768xbf16, #tpu.memory_space<vmem>>, vector<8x256xbf16>,
    %c0_10 = arith.constant 0 : index
    %c0_11 = arith.constant 0 : index
    %28 = vector.load %arg12[%c0_10, %c0_11] : memref<8x768xbf16, #tpu.memory_space<vmem>>, vector<8x768xbf16>
    %29 = vector.extract_strided_slice %28 {offsets = [0, 111], sizes = [8, 512], strides = [1, 1]} : vector<8x768xbf16> to vector<8x512xbf16>
    %30 = arith.andi %10, %6 : vector<1x512xi1>
    %cst_12 = arith.constant 0.000000e+00 : bf16
    %31 = vector.broadcast %cst_12 : bf16 to vector<8x512xbf16>
    %32 = vector.shape_cast %30 : vector<1x512xi1> to vector<1x512xi1>
    %33 = vector.broadcast %32 : vector<1x512xi1> to vector<8x512xi1>
    %34 = arith.select %33, %29, %31 : vector<8x512xi1>, vector<8x512xbf16>
    %c0_13 = arith.constant 0 : index
    %c0_14 = arith.constant 0 : index
    %35 = vector.load %arg13[%c0_13, %c0_14] : memref<72x512xbf16, #tpu.memory_space<vmem>>, vector<8x512xbf16>
    tpu.vector_store %arg13[%c0_13, %c0_14], %34 {strides = array<i32>} : memref<72x512xbf16, #tpu.memory_space<vmem>>, vector<8x512xbf16>,
    %36 = vector.extract_strided_slice %28 {offsets = [0, 112], sizes = [8, 512], strides = [1, 1]} : vector<8x768xbf16> to vector<8x512xbf16>
    %cst_15 = arith.constant 0.000000e+00 : bf16
    %37 = vector.broadcast %cst_15 : bf16 to vector<8x512xbf16>
    %38 = vector.shape_cast %10 : vector<1x512xi1> to vector<1x512xi1>
    %39 = vector.broadcast %38 : vector<1x512xi1> to vector<8x512xi1>
    %40 = arith.select %39, %36, %37 : vector<8x512xi1>, vector<8x512xbf16>
    %c8 = arith.constant 8 : index
    %c0_16 = arith.constant 0 : index
    %41 = vector.load %arg13[%c8, %c0_16] : memref<72x512xbf16, #tpu.memory_space<vmem>>, vector<8x512xbf16>
    tpu.vector_store %arg13[%c8, %c0_16], %40 {strides = array<i32>} : memref<72x512xbf16, #tpu.memory_space<vmem>>, vector<8x512xbf16>,
    %42 = vector.extract_strided_slice %28 {offsets = [0, 113], sizes = [8, 512], strides = [1, 1]} : vector<8x768xbf16> to vector<8x512xbf16>
    %43 = arith.andi %10, %8 : vector<1x512xi1>
    %cst_17 = arith.constant 0.000000e+00 : bf16
    %44 = vector.broadcast %cst_17 : bf16 to vector<8x512xbf16>
    %45 = vector.shape_cast %43 : vector<1x512xi1> to vector<1x512xi1>
    %46 = vector.broadcast %45 : vector<1x512xi1> to vector<8x512xi1>
    %47 = arith.select %46, %42, %44 : vector<8x512xi1>, vector<8x512xbf16>
    %c16 = arith.constant 16 : index
    %c0_18 = arith.constant 0 : index
    %48 = vector.load %arg13[%c16, %c0_18] : memref<72x512xbf16, #tpu.memory_space<vmem>>, vector<8x512xbf16>
    tpu.vector_store %arg13[%c16, %c0_18], %47 {strides = array<i32>} : memref<72x512xbf16, #tpu.memory_space<vmem>>, vector<8x512xbf16>,
    %49 = vector.extract_strided_slice %28 {offsets = [0, 127], sizes = [8, 512], strides = [1, 1]} : vector<8x768xbf16> to vector<8x512xbf16>
    %cst_19 = arith.constant 0.000000e+00 : bf16
    %50 = vector.broadcast %cst_19 : bf16 to vector<8x512xbf16>
    %51 = vector.shape_cast %6 : vector<1x512xi1> to vector<1x512xi1>
    %52 = vector.broadcast %51 : vector<1x512xi1> to vector<8x512xi1>
    %53 = arith.select %52, %49, %50 : vector<8x512xi1>, vector<8x512xbf16>
    %c24 = arith.constant 24 : index
    %c0_20 = arith.constant 0 : index
    %54 = vector.load %arg13[%c24, %c0_20] : memref<72x512xbf16, #tpu.memory_space<vmem>>, vector<8x512xbf16>
    tpu.vector_store %arg13[%c24, %c0_20], %53 {strides = array<i32>} : memref<72x512xbf16, #tpu.memory_space<vmem>>, vector<8x512xbf16>,
    %55 = vector.extract_strided_slice %28 {offsets = [0, 128], sizes = [8, 512], strides = [1, 1]} : vector<8x768xbf16> to vector<8x512xbf16>
    %c32 = arith.constant 32 : index
    %c0_21 = arith.constant 0 : index
    %56 = vector.load %arg13[%c32, %c0_21] : memref<72x512xbf16, #tpu.memory_space<vmem>>, vector<8x512xbf16>
    tpu.vector_store %arg13[%c32, %c0_21], %55 {strides = array<i32>} : memref<72x512xbf16, #tpu.memory_space<vmem>>, vector<8x512xbf16>,
    %57 = vector.extract_strided_slice %28 {offsets = [0, 129], sizes = [8, 512], strides = [1, 1]} : vector<8x768xbf16> to vector<8x512xbf16>
    %cst_22 = arith.constant 0.000000e+00 : bf16
    %58 = vector.broadcast %cst_22 : bf16 to vector<8x512xbf16>
    %59 = vector.shape_cast %8 : vector<1x512xi1> to vector<1x512xi1>
    %60 = vector.broadcast %59 : vector<1x512xi1> to vector<8x512xi1>
    %61 = arith.select %60, %57, %58 : vector<8x512xi1>, vector<8x512xbf16>
    %c40 = arith.constant 40 : index
    %c0_23 = arith.constant 0 : index
    %62 = vector.load %arg13[%c40, %c0_23] : memref<72x512xbf16, #tpu.memory_space<vmem>>, vector<8x512xbf16>
    tpu.vector_store %arg13[%c40, %c0_23], %61 {strides = array<i32>} : memref<72x512xbf16, #tpu.memory_space<vmem>>, vector<8x512xbf16>,
    %63 = vector.extract_strided_slice %28 {offsets = [0, 143], sizes = [8, 512], strides = [1, 1]} : vector<8x768xbf16> to vector<8x512xbf16>
    %64 = arith.andi %12, %6 : vector<1x512xi1>
    %cst_24 = arith.constant 0.000000e+00 : bf16
    %65 = vector.broadcast %cst_24 : bf16 to vector<8x512xbf16>
    %66 = vector.shape_cast %64 : vector<1x512xi1> to vector<1x512xi1>
    %67 = vector.broadcast %66 : vector<1x512xi1> to vector<8x512xi1>
    %68 = arith.select %67, %63, %65 : vector<8x512xi1>, vector<8x512xbf16>
    %c48 = arith.constant 48 : index
    %c0_25 = arith.constant 0 : index
    %69 = vector.load %arg13[%c48, %c0_25] : memref<72x512xbf16, #tpu.memory_space<vmem>>, vector<8x512xbf16>
    tpu.vector_store %arg13[%c48, %c0_25], %68 {strides = array<i32>} : memref<72x512xbf16, #tpu.memory_space<vmem>>, vector<8x512xbf16>,
    %70 = vector.extract_strided_slice %28 {offsets = [0, 144], sizes = [8, 512], strides = [1, 1]} : vector<8x768xbf16> to vector<8x512xbf16>
    %cst_26 = arith.constant 0.000000e+00 : bf16
    %71 = vector.broadcast %cst_26 : bf16 to vector<8x512xbf16>
    %72 = vector.shape_cast %12 : vector<1x512xi1> to vector<1x512xi1>
    %73 = vector.broadcast %72 : vector<1x512xi1> to vector<8x512xi1>
    %74 = arith.select %73, %70, %71 : vector<8x512xi1>, vector<8x512xbf16>
    %c56 = arith.constant 56 : index
    %c0_27 = arith.constant 0 : index
    %75 = vector.load %arg13[%c56, %c0_27] : memref<72x512xbf16, #tpu.memory_space<vmem>>, vector<8x512xbf16>
    tpu.vector_store %arg13[%c56, %c0_27], %74 {strides = array<i32>} : memref<72x512xbf16, #tpu.memory_space<vmem>>, vector<8x512xbf16>,
    %76 = vector.extract_strided_slice %28 {offsets = [0, 145], sizes = [8, 512], strides = [1, 1]} : vector<8x768xbf16> to vector<8x512xbf16>
    %77 = arith.andi %12, %8 : vector<1x512xi1>
    %cst_28 = arith.constant 0.000000e+00 : bf16
    %78 = vector.broadcast %cst_28 : bf16 to vector<8x512xbf16>
    %79 = vector.shape_cast %77 : vector<1x512xi1> to vector<1x512xi1>
    %80 = vector.broadcast %79 : vector<1x512xi1> to vector<8x512xi1>
    %81 = arith.select %80, %76, %78 : vector<8x512xi1>, vector<8x512xbf16>
    %c64 = arith.constant 64 : index
    %c0_29 = arith.constant 0 : index
    %82 = vector.load %arg13[%c64, %c0_29] : memref<72x512xbf16, #tpu.memory_space<vmem>>, vector<8x512xbf16>
    tpu.vector_store %arg13[%c64, %c0_29], %81 {strides = array<i32>} : memref<72x512xbf16, #tpu.memory_space<vmem>>, vector<8x512xbf16>,
    %c0_30 = arith.constant 0 : index
    %c0_31 = arith.constant 0 : index
    %83 = vector.load %arg3[%c0_30, %c0_31] : memref<8x72xbf16, #tpu.memory_space<vmem>>, vector<8x72xbf16>
    %c0_32 = arith.constant 0 : index
    %c0_33 = arith.constant 0 : index
    %84 = vector.load %arg13[%c0_32, %c0_33] : memref<72x512xbf16, #tpu.memory_space<vmem>>, vector<72x512xbf16>
    %cst_34 = arith.constant dense<0.000000e+00> : vector<8x512xf32>
    %85 = tpu.matmul %83, %84, %cst_34 {dimension_numbers = #tpu.dot_dimension_numbers<[1], [0], [0], [1], [0, 0, 1, 1], [], []>} : vector<8x72xbf16>, vector<72x512xbf16>, vector<8x512xf32> -> vector<8x512xf32>
    %c0_35 = arith.constant 0 : index
    %c0_36 = arith.constant 0 : index
    %86 = vector.load %arg4[%c0_35, %c0_36] : memref<8x1xf32, #tpu.memory_space<vmem>>, vector<8x1xf32>
    %87 = vector.broadcast %86 : vector<8x1xf32> to vector<8x512xf32>
    %88 = arith.addf %85, %87 : vector<8x512xf32>
    %cst_37 = arith.constant 0.000000e+00 : f32
    %89 = vector.broadcast %cst_37 : f32 to vector<8x512xf32>
    %90 = arith.maximumf %88, %89 : vector<8x512xf32>
    %91 = arith.truncf %90 : vector<8x512xf32> to vector<8x512xbf16>
    %cst_38 = arith.constant 0.000000e+00 : bf16
    %92 = vector.broadcast %cst_38 : bf16 to vector<16x128xbf16>
    %c0_39 = arith.constant 0 : index
    %c0_40 = arith.constant 0 : index
    %93 = vector.load %arg14[%c0_39, %c0_40] : memref<16x512xbf16, #tpu.memory_space<vmem>>, vector<16x128xbf16>
    tpu.vector_store %arg14[%c0_39, %c0_40], %92 {strides = array<i32>} : memref<16x512xbf16, #tpu.memory_space<vmem>>, vector<16x128xbf16>,
    %c0_41 = arith.constant 0 : index
    %c384_42 = arith.constant 384 : index
    %94 = vector.load %arg14[%c0_41, %c384_42] : memref<16x512xbf16, #tpu.memory_space<vmem>>, vector<16x128xbf16>
    tpu.vector_store %arg14[%c0_41, %c384_42], %92 {strides = array<i32>} : memref<16x512xbf16, #tpu.memory_space<vmem>>, vector<16x128xbf16>,
    %95 = vector.extract_strided_slice %91 {offsets = [0, 0], sizes = [8, 256], strides = [1, 1]} : vector<8x512xbf16> to vector<8x256xbf16>
    %c0_43 = arith.constant 0 : index
    %c128_44 = arith.constant 128 : index
    %96 = vector.load %arg14[%c0_43, %c128_44] : memref<16x512xbf16, #tpu.memory_space<vmem>>, vector<8x256xbf16>
    tpu.vector_store %arg14[%c0_43, %c128_44], %95 {strides = array<i32>} : memref<16x512xbf16, #tpu.memory_space<vmem>>, vector<8x256xbf16>,
    %97 = vector.extract_strided_slice %91 {offsets = [0, 256], sizes = [8, 256], strides = [1, 1]} : vector<8x512xbf16> to vector<8x256xbf16>
    %c8_45 = arith.constant 8 : index
    %c128_46 = arith.constant 128 : index
    %98 = vector.load %arg14[%c8_45, %c128_46] : memref<16x512xbf16, #tpu.memory_space<vmem>>, vector<8x256xbf16>
    tpu.vector_store %arg14[%c8_45, %c128_46], %97 {strides = array<i32>} : memref<16x512xbf16, #tpu.memory_space<vmem>>, vector<8x256xbf16>,
    %c0_47 = arith.constant 0 : index
    %c128_48 = arith.constant 128 : index
    %99 = vector.load %arg14[%c0_47, %c128_48] : memref<16x512xbf16, #tpu.memory_space<vmem>>, vector<16x256xbf16>
    %c0_49 = arith.constant 0 : index
    %c0_50 = arith.constant 0 : index
    %c0_51 = arith.constant 0 : index
    %100 = vector.load %arg9[%c0_49, %c0_50, %c0_51] : memref<1x16x256xbf16, #tpu.memory_space<vmem>>, vector<1x16x256xbf16>
    %101 = vector.shape_cast %100 : vector<1x16x256xbf16> to vector<16x256xbf16>
    %102 = vector.shape_cast %99 : vector<16x256xbf16> to vector<1x16x256xbf16>
    tpu.vector_store %arg9[%c0_49, %c0_50, %c0_51], %102 {strides = array<i32>} : memref<1x16x256xbf16, #tpu.memory_space<vmem>>, vector<1x16x256xbf16>,
    %c0_52 = arith.constant 0 : index
    %c0_53 = arith.constant 0 : index
    %103 = vector.load %arg14[%c0_52, %c0_53] : memref<16x512xbf16, #tpu.memory_space<vmem>>, vector<16x512xbf16>
    %104 = vector.extract_strided_slice %103 {offsets = [0, 111], sizes = [16, 256], strides = [1, 1]} : vector<16x512xbf16> to vector<16x256xbf16>
    %105 = arith.andi %15, %13 : vector<1x256xi1>
    %cst_54 = arith.constant 0.000000e+00 : bf16
    %106 = vector.broadcast %cst_54 : bf16 to vector<16x256xbf16>
    %107 = vector.shape_cast %105 : vector<1x256xi1> to vector<1x256xi1>
    %108 = vector.broadcast %107 : vector<1x256xi1> to vector<16x256xi1>
    %109 = arith.select %108, %104, %106 : vector<16x256xi1>, vector<16x256xbf16>
    %c0_55 = arith.constant 0 : index
    %c0_56 = arith.constant 0 : index
    %110 = vector.load %arg15[%c0_55, %c0_56] : memref<144x256xbf16, #tpu.memory_space<vmem>>, vector<16x256xbf16>
    tpu.vector_store %arg15[%c0_55, %c0_56], %109 {strides = array<i32>} : memref<144x256xbf16, #tpu.memory_space<vmem>>, vector<16x256xbf16>,
    %111 = vector.extract_strided_slice %103 {offsets = [0, 112], sizes = [16, 256], strides = [1, 1]} : vector<16x512xbf16> to vector<16x256xbf16>
    %cst_57 = arith.constant 0.000000e+00 : bf16
    %112 = vector.broadcast %cst_57 : bf16 to vector<16x256xbf16>
    %113 = vector.shape_cast %15 : vector<1x256xi1> to vector<1x256xi1>
    %114 = vector.broadcast %113 : vector<1x256xi1> to vector<16x256xi1>
    %115 = arith.select %114, %111, %112 : vector<16x256xi1>, vector<16x256xbf16>
    %c16_58 = arith.constant 16 : index
    %c0_59 = arith.constant 0 : index
    %116 = vector.load %arg15[%c16_58, %c0_59] : memref<144x256xbf16, #tpu.memory_space<vmem>>, vector<16x256xbf16>
    tpu.vector_store %arg15[%c16_58, %c0_59], %115 {strides = array<i32>} : memref<144x256xbf16, #tpu.memory_space<vmem>>, vector<16x256xbf16>,
    %117 = vector.extract_strided_slice %103 {offsets = [0, 113], sizes = [16, 256], strides = [1, 1]} : vector<16x512xbf16> to vector<16x256xbf16>
    %118 = arith.andi %15, %14 : vector<1x256xi1>
    %cst_60 = arith.constant 0.000000e+00 : bf16
    %119 = vector.broadcast %cst_60 : bf16 to vector<16x256xbf16>
    %120 = vector.shape_cast %118 : vector<1x256xi1> to vector<1x256xi1>
    %121 = vector.broadcast %120 : vector<1x256xi1> to vector<16x256xi1>
    %122 = arith.select %121, %117, %119 : vector<16x256xi1>, vector<16x256xbf16>
    %c32_61 = arith.constant 32 : index
    %c0_62 = arith.constant 0 : index
    %123 = vector.load %arg15[%c32_61, %c0_62] : memref<144x256xbf16, #tpu.memory_space<vmem>>, vector<16x256xbf16>
    tpu.vector_store %arg15[%c32_61, %c0_62], %122 {strides = array<i32>} : memref<144x256xbf16, #tpu.memory_space<vmem>>, vector<16x256xbf16>,
    %124 = vector.extract_strided_slice %103 {offsets = [0, 127], sizes = [16, 256], strides = [1, 1]} : vector<16x512xbf16> to vector<16x256xbf16>
    %cst_63 = arith.constant 0.000000e+00 : bf16
    %125 = vector.broadcast %cst_63 : bf16 to vector<16x256xbf16>
    %126 = vector.shape_cast %13 : vector<1x256xi1> to vector<1x256xi1>
    %127 = vector.broadcast %126 : vector<1x256xi1> to vector<16x256xi1>
    %128 = arith.select %127, %124, %125 : vector<16x256xi1>, vector<16x256xbf16>
    %c48_64 = arith.constant 48 : index
    %c0_65 = arith.constant 0 : index
    %129 = vector.load %arg15[%c48_64, %c0_65] : memref<144x256xbf16, #tpu.memory_space<vmem>>, vector<16x256xbf16>
    tpu.vector_store %arg15[%c48_64, %c0_65], %128 {strides = array<i32>} : memref<144x256xbf16, #tpu.memory_space<vmem>>, vector<16x256xbf16>,
    %130 = vector.extract_strided_slice %103 {offsets = [0, 128], sizes = [16, 256], strides = [1, 1]} : vector<16x512xbf16> to vector<16x256xbf16>
    %c64_66 = arith.constant 64 : index
    %c0_67 = arith.constant 0 : index
    %131 = vector.load %arg15[%c64_66, %c0_67] : memref<144x256xbf16, #tpu.memory_space<vmem>>, vector<16x256xbf16>
    tpu.vector_store %arg15[%c64_66, %c0_67], %130 {strides = array<i32>} : memref<144x256xbf16, #tpu.memory_space<vmem>>, vector<16x256xbf16>,
    %132 = vector.extract_strided_slice %103 {offsets = [0, 129], sizes = [16, 256], strides = [1, 1]} : vector<16x512xbf16> to vector<16x256xbf16>
    %cst_68 = arith.constant 0.000000e+00 : bf16
    %133 = vector.broadcast %cst_68 : bf16 to vector<16x256xbf16>
    %134 = vector.shape_cast %14 : vector<1x256xi1> to vector<1x256xi1>
    %135 = vector.broadcast %134 : vector<1x256xi1> to vector<16x256xi1>
    %136 = arith.select %135, %132, %133 : vector<16x256xi1>, vector<16x256xbf16>
    %c80 = arith.constant 80 : index
    %c0_69 = arith.constant 0 : index
    %137 = vector.load %arg15[%c80, %c0_69] : memref<144x256xbf16, #tpu.memory_space<vmem>>, vector<16x256xbf16>
    tpu.vector_store %arg15[%c80, %c0_69], %136 {strides = array<i32>} : memref<144x256xbf16, #tpu.memory_space<vmem>>, vector<16x256xbf16>,
    %138 = vector.extract_strided_slice %103 {offsets = [0, 143], sizes = [16, 256], strides = [1, 1]} : vector<16x512xbf16> to vector<16x256xbf16>
    %139 = arith.andi %16, %13 : vector<1x256xi1>
    %cst_70 = arith.constant 0.000000e+00 : bf16
    %140 = vector.broadcast %cst_70 : bf16 to vector<16x256xbf16>
    %141 = vector.shape_cast %139 : vector<1x256xi1> to vector<1x256xi1>
    %142 = vector.broadcast %141 : vector<1x256xi1> to vector<16x256xi1>
    %143 = arith.select %142, %138, %140 : vector<16x256xi1>, vector<16x256xbf16>
    %c96 = arith.constant 96 : index
    %c0_71 = arith.constant 0 : index
    %144 = vector.load %arg15[%c96, %c0_71] : memref<144x256xbf16, #tpu.memory_space<vmem>>, vector<16x256xbf16>
    tpu.vector_store %arg15[%c96, %c0_71], %143 {strides = array<i32>} : memref<144x256xbf16, #tpu.memory_space<vmem>>, vector<16x256xbf16>,
    %145 = vector.extract_strided_slice %103 {offsets = [0, 144], sizes = [16, 256], strides = [1, 1]} : vector<16x512xbf16> to vector<16x256xbf16>
    %cst_72 = arith.constant 0.000000e+00 : bf16
    %146 = vector.broadcast %cst_72 : bf16 to vector<16x256xbf16>
    %147 = vector.shape_cast %16 : vector<1x256xi1> to vector<1x256xi1>
    %148 = vector.broadcast %147 : vector<1x256xi1> to vector<16x256xi1>
    %149 = arith.select %148, %145, %146 : vector<16x256xi1>, vector<16x256xbf16>
    %c112 = arith.constant 112 : index
    %c0_73 = arith.constant 0 : index
    %150 = vector.load %arg15[%c112, %c0_73] : memref<144x256xbf16, #tpu.memory_space<vmem>>, vector<16x256xbf16>
    tpu.vector_store %arg15[%c112, %c0_73], %149 {strides = array<i32>} : memref<144x256xbf16, #tpu.memory_space<vmem>>, vector<16x256xbf16>,
    %151 = vector.extract_strided_slice %103 {offsets = [0, 145], sizes = [16, 256], strides = [1, 1]} : vector<16x512xbf16> to vector<16x256xbf16>
    %152 = arith.andi %16, %14 : vector<1x256xi1>
    %cst_74 = arith.constant 0.000000e+00 : bf16
    %153 = vector.broadcast %cst_74 : bf16 to vector<16x256xbf16>
    %154 = vector.shape_cast %152 : vector<1x256xi1> to vector<1x256xi1>
    %155 = vector.broadcast %154 : vector<1x256xi1> to vector<16x256xi1>
    %156 = arith.select %155, %151, %153 : vector<16x256xi1>, vector<16x256xbf16>
    %c128_75 = arith.constant 128 : index
    %c0_76 = arith.constant 0 : index
    %157 = vector.load %arg15[%c128_75, %c0_76] : memref<144x256xbf16, #tpu.memory_space<vmem>>, vector<16x256xbf16>
    tpu.vector_store %arg15[%c128_75, %c0_76], %156 {strides = array<i32>} : memref<144x256xbf16, #tpu.memory_space<vmem>>, vector<16x256xbf16>,
    %c0_77 = arith.constant 0 : index
    %c0_78 = arith.constant 0 : index
    %158 = vector.load %arg5[%c0_77, %c0_78] : memref<16x144xbf16, #tpu.memory_space<vmem>>, vector<16x144xbf16>
    %c0_79 = arith.constant 0 : index
    %c0_80 = arith.constant 0 : index
    %159 = vector.load %arg15[%c0_79, %c0_80] : memref<144x256xbf16, #tpu.memory_space<vmem>>, vector<144x256xbf16>
    %cst_81 = arith.constant dense<0.000000e+00> : vector<16x256xf32>
    %160 = tpu.matmul %158, %159, %cst_81 {dimension_numbers = #tpu.dot_dimension_numbers<[1], [0], [0], [1], [0, 0, 1, 1], [], []>} : vector<16x144xbf16>, vector<144x256xbf16>, vector<16x256xf32> -> vector<16x256xf32>
    %c0_82 = arith.constant 0 : index
    %c0_83 = arith.constant 0 : index
    %161 = vector.load %arg6[%c0_82, %c0_83] : memref<16x1xf32, #tpu.memory_space<vmem>>, vector<16x1xf32>
    %162 = vector.broadcast %161 : vector<16x1xf32> to vector<16x256xf32>
    %163 = arith.addf %160, %162 : vector<16x256xf32>
    %cst_84 = arith.constant 0.000000e+00 : f32
    %164 = vector.broadcast %cst_84 : f32 to vector<16x256xf32>
    %165 = arith.maximumf %163, %164 : vector<16x256xf32>
    %c0_85 = arith.constant 0 : index
    %c0_86 = arith.constant 0 : index
    %166 = vector.load %arg7[%c0_85, %c0_86] : memref<15x16xbf16, #tpu.memory_space<vmem>>, vector<15x16xbf16>
    %167 = arith.truncf %165 : vector<16x256xf32> to vector<16x256xbf16>
    %cst_87 = arith.constant dense<0.000000e+00> : vector<15x256xf32>
    %168 = tpu.matmul %166, %167, %cst_87 {dimension_numbers = #tpu.dot_dimension_numbers<[1], [0], [0], [1], [0, 0, 1, 1], [], []>} : vector<15x16xbf16>, vector<16x256xbf16>, vector<15x256xf32> -> vector<15x256xf32>
    %c0_88 = arith.constant 0 : index
    %c0_89 = arith.constant 0 : index
    %169 = vector.load %arg8[%c0_88, %c0_89] : memref<15x1xf32, #tpu.memory_space<vmem>>, vector<15x1xf32>
    %170 = vector.broadcast %169 : vector<15x1xf32> to vector<15x256xf32>
    %171 = arith.addf %168, %170 : vector<15x256xf32>
    %172 = vector.extract_strided_slice %171 {offsets = [0, 0], sizes = [3, 256], strides = [1, 1]} : vector<15x256xf32> to vector<3x256xf32>
    %c0_90 = arith.constant 0 : index
    %c0_91 = arith.constant 0 : index
    %c0_92 = arith.constant 0 : index
    %173 = vector.load %arg10[%c0_90, %c0_91, %c0_92] : memref<1x3x256xf32, #tpu.memory_space<vmem>>, vector<1x3x256xf32>
    %174 = vector.shape_cast %173 : vector<1x3x256xf32> to vector<3x256xf32>
    %175 = vector.shape_cast %172 : vector<3x256xf32> to vector<1x3x256xf32>
    tpu.vector_store %arg10[%c0_90, %c0_91, %c0_92], %175 {strides = array<i32>} : memref<1x3x256xf32, #tpu.memory_space<vmem>>, vector<1x3x256xf32>,
    %176 = vector.extract_strided_slice %171 {offsets = [3, 0], sizes = [12, 256], strides = [1, 1]} : vector<15x256xf32> to vector<12x256xf32>
    %c0_93 = arith.constant 0 : index
    %c0_94 = arith.constant 0 : index
    %c0_95 = arith.constant 0 : index
    %177 = vector.load %arg11[%c0_93, %c0_94, %c0_95] : memref<1x12x256xf32, #tpu.memory_space<vmem>>, vector<1x12x256xf32>
    %178 = vector.shape_cast %177 : vector<1x12x256xf32> to vector<12x256xf32>
    %179 = vector.shape_cast %176 : vector<12x256xf32> to vector<1x12x256xf32>
    tpu.vector_store %arg11[%c0_93, %c0_94, %c0_95], %179 {strides = array<i32>} : memref<1x12x256xf32, #tpu.memory_space<vmem>>, vector<1x12x256xf32>,
    return
  }
  func.func @transform_0(%arg0: i32) -> (i32, i32, i32) {
    %c0_i32 = arith.constant 0 : i32
    %c0_i32_0 = arith.constant 0 : i32
    %c0_i32_1 = arith.constant 0 : i32
    return %arg0, %c0_i32, %c0_i32_0 : i32, i32, i32
  }
  func.func @transform_1(%arg0: i32) -> (i32, i32, i32) {
    %c0_i32 = arith.constant 0 : i32
    %c0_i32_0 = arith.constant 0 : i32
    %c0_i32_1 = arith.constant 0 : i32
    return %arg0, %c0_i32, %c0_i32_0 : i32, i32, i32
  }
  func.func @transform_2(%arg0: i32) -> (i32, i32) {
    %c0_i32 = arith.constant 0 : i32
    %c0_i32_0 = arith.constant 0 : i32
    %c0_i32_1 = arith.constant 0 : i32
    return %c0_i32, %c0_i32_0 : i32, i32
  }
  func.func @transform_3(%arg0: i32) -> (i32, i32) {
    %c0_i32 = arith.constant 0 : i32
    %c0_i32_0 = arith.constant 0 : i32
    %c0_i32_1 = arith.constant 0 : i32
    return %c0_i32, %c0_i32_0 : i32, i32
  }
  func.func @transform_4(%arg0: i32) -> (i32, i32) {
    %c0_i32 = arith.constant 0 : i32
    %c0_i32_0 = arith.constant 0 : i32
    %c0_i32_1 = arith.constant 0 : i32
    return %c0_i32, %c0_i32_0 : i32, i32
  }
  func.func @transform_5(%arg0: i32) -> (i32, i32) {
    %c0_i32 = arith.constant 0 : i32
    %c0_i32_0 = arith.constant 0 : i32
    %c0_i32_1 = arith.constant 0 : i32
    return %c0_i32, %c0_i32_0 : i32, i32
  }
  func.func @transform_6(%arg0: i32) -> (i32, i32) {
    %c0_i32 = arith.constant 0 : i32
    %c0_i32_0 = arith.constant 0 : i32
    %c0_i32_1 = arith.constant 0 : i32
    return %c0_i32, %c0_i32_0 : i32, i32
  }
  func.func @transform_7(%arg0: i32) -> (i32, i32) {
    %c0_i32 = arith.constant 0 : i32
    %c0_i32_0 = arith.constant 0 : i32
    %c0_i32_1 = arith.constant 0 : i32
    return %c0_i32, %c0_i32_0 : i32, i32
  }
  func.func @transform_8(%arg0: i32) -> (i32, i32, i32) {
    %c0_i32 = arith.constant 0 : i32
    %c0_i32_0 = arith.constant 0 : i32
    %c0_i32_1 = arith.constant 0 : i32
    return %arg0, %c0_i32, %c0_i32_0 : i32, i32, i32
  }
  func.func @transform_9(%arg0: i32) -> (i32, i32, i32) {
    %c0_i32 = arith.constant 0 : i32
    %c0_i32_0 = arith.constant 0 : i32
    %c0_i32_1 = arith.constant 0 : i32
    return %arg0, %c0_i32, %c0_i32_0 : i32, i32, i32
  }
  func.func @transform_10(%arg0: i32) -> (i32, i32, i32) {
    %c0_i32 = arith.constant 0 : i32
    %c0_i32_0 = arith.constant 0 : i32
    %c0_i32_1 = arith.constant 0 : i32
    return %arg0, %c0_i32, %c0_i32_0 : i32, i32, i32
  }
}

</mosaic_0001>

<llo_original>
// kernel: tpu_custom_call.1
$region0: #{tpu_custom_call.1}
  #allocation0 [shape = 'u32[]', space=smem, size = 0x4, offset = 0x4, fixed_abs, tag = 'smem constant byte address 0x4 - core index']
  #allocation1 [shape = 'u32[144,128]{1,0:T(1,128)}', space=vmem, size = 0x12000, scoped, tag = 'internal scratch']
  #allocation2 [shape = 'bf16[8,768]{1,0:T(8,128)(2,1)}', space=vmem, size = 0x3000, scoped, tag = 'scratch operand']
  #allocation3 [shape = 'bf16[72,512]{1,0:T(8,128)(2,1)}', space=vmem, size = 0x12000, scoped, tag = 'scratch operand']
  #allocation4 [shape = 'bf16[16,512]{1,0:T(8,128)(2,1)}', space=vmem, size = 0x4000, scoped, tag = 'scratch operand']
  #allocation5 [shape = 'bf16[144,256]{1,0:T(8,128)(2,1)}', space=vmem, size = 0x12000, scoped, tag = 'scratch operand']
  %s0 = inlined_call_operand.vmem [shape: f32[2,8,256], index: 0, kind: input, shape index: {}]
  %s1 = inlined_call_operand.hbm [shape: f32[2,8,256], index: 1, kind: input, shape index: {}]
  %s2 = inlined_call_operand.hbm [shape: bf16[8,72], index: 2, kind: input, shape index: {}]
  %s3 = inlined_call_operand.vmem [shape: f32[8,1], index: 3, kind: input, shape index: {}]
  %s4 = inlined_call_operand.vmem [shape: bf16[16,144], index: 4, kind: input, shape index: {}]
  %s5 = inlined_call_operand.vmem [shape: f32[16,1], index: 5, kind: input, shape index: {}]
  %s6 = inlined_call_operand.hbm [shape: bf16[15,16], index: 6, kind: input, shape index: {}]
  %s7 = inlined_call_operand.vmem [shape: f32[15,1], index: 7, kind: input, shape index: {}]
  %s8 = inlined_call_operand.hbm [shape: bf16[2,16,256], index: 8, kind: output, shape index: {0}]
  %s9 = inlined_call_operand.vmem [shape: f32[2,3,256], index: 9, kind: output, shape index: {1}]
  %s10 = inlined_call_operand.vmem [shape: f32[2,12,256], index: 10, kind: output, shape index: {2}]
  %11 = xla_tuple %s8, %s9, %s10
  %s12 = sld [smem:[#allocation0]]
  $region93: #{tpu_custom_call.1} parent=0
    _
  %s14 = ssub.s32 1, %s12
  %s15 = scalar_select 0, %s14, %s12
  $region1: #{tpu_custom_call.1} parent=0
    #allocation6 [shape = 'u8[16384]{0}', space=vmem, size = 0x4000, scoped, tag = 'input window, operand 1']
    #allocation7 [shape = 's32[2]{0}', space=sflag, size = 0x8, scoped, tag = 'scoped memory for tpu_custom_call.1']
    #allocation8 [shape = 's32[2]{0}', space=sflag, size = 0x8, scoped, tag = 'scoped memory for tpu_custom_call.1']
    #allocation9 [shape = 'u8[2048]{0}', space=vmem, size = 0x800, scoped, tag = 'input window, operand 2, single buffered']
    #allocation10 [shape = 's32[1]{0}', space=sflag, size = 0x4, scoped, tag = 'scoped memory for tpu_custom_call.1']
    #allocation11 [shape = 'u8[4096]{0}', space=vmem, size = 0x1000, scoped, tag = 'input window, operand 6, single buffered']
    #allocation12 [shape = 'u8[16384]{0}', space=vmem, size = 0x4000, scoped, tag = 'output window, operand 0']
    %16 = vsyncpa [#allocation7], 0
    %s17 = scalar_lea.sflag [#allocation7], 1
    %18 = vsyncpa %s17, 0
    %19 = vsyncpa [#allocation10], 0
    %20 = vsyncpa [#allocation8], 0
    %s21 = scalar_lea.sflag [#allocation8], 1
    %22 = vsyncpa %s21, 0
    loop: start=0, step=1, limit=4
    $region2: #{tpu_custom_call.1} parent=1 // loop_pre_header
      _
    $region3: #{tpu_custom_call.1} parent=1 // loop_header
      %s24 = sphi 0, %s28
      %p25 = scmp.ge.s32.totalorder %s24, 4
      %s34 = sphi 0, %s36
      %s37 = sphi 0, %s34
      %s38 = sphi 0, %s37
      %s54 = sphi 0, %s38
      %s60 = sphi 0, %s62
      %s63 = sphi 0, %s60
      %s64 = sphi 0, %s63
      %s80 = sphi 0, %s64
      %s84 = sphi 0, %s84
      %s86 = sphi 0, %s84
      %s87 = sphi 0, %s86
      %s101 = sphi 0, %s87
      %s105 = sphi 0, %s105
      %s107 = sphi 0, %s105
      %s108 = sphi 0, %s107
      %s122 = sphi 0, %s108
      %s126 = sphi 0, %s126
      %s128 = sphi 0, %s126
      %s129 = sphi 0, %s128
      %s143 = sphi 0, %s129
      %s147 = sphi 0, %s147
      %s149 = sphi 0, %s147
      %s150 = sphi 0, %s149
      %s164 = sphi 0, %s150
      %s168 = sphi 0, %s168
      %s170 = sphi 0, %s168
      %s171 = sphi 0, %s170
      %s185 = sphi 0, %s171
      %s189 = sphi 0, %s189
      %s191 = sphi 0, %s189
      %s192 = sphi 0, %s191
      %s206 = sphi 0, %s192
      %s212 = sphi 0, %s214
      %s215 = sphi 0, %s212
      %s216 = sphi 0, %s215
      %s232 = sphi 0, %s216
      %s238 = sphi 0, %s240
      %s241 = sphi 0, %s238
      %s242 = sphi 0, %s241
      %s258 = sphi 0, %s242
      %s264 = sphi 0, %s266
      %s267 = sphi 0, %s264
      %s268 = sphi 0, %s267
      %s284 = sphi 0, %s268
    $region4: #{tpu_custom_call.1} parent=1 // loop_header_branch
      %27 = sbr.rel (%p25) target = $region8
    $region5: #{tpu_custom_call.1} parent=1 // loop_body
      %s29 = ssub.s32 %s24, 1
      %s30 = ssub.s32 %s24, 2
      %s31 = sadd.s32 %s24, 1
      %s32 = ssub.s32 %s24, %s31
      %p33 = scmp.eq.s32.totalorder %s32, 0
      %s35 = sadd.s32 %s34, 1
      %s36 = scalar_select %p33, %s34, %s35
      %p39 = pneg %p33
      %p40 = scmp.eq.s32.totalorder %s24, 1
      %p41 = por %p39, %p40
      %p42 = scmp.ne.s32.totalorder %s34, %s37
      %p43 = scmp.eq.s32.totalorder %s24, 0
      %p44 = por %p42, %p43
      %p45 = scmp.ne.s32.totalorder %s34, %s37
      %p46 = scmp.eq.s32.totalorder %s29, 1
      %p47 = por %p45, %p46
      %p48 = scmp.ne.s32.totalorder %s37, %s38
      %p49 = scmp.eq.s32.totalorder %s29, 0
      %p50 = por %p48, %p49
      %p51 = scmp.ne.s32.totalorder %s37, %s38
      %p52 = scmp.eq.s32.totalorder %s30, 1
      %p53 = por %p51, %p52
      %p55 = scmp.ne.s32.totalorder %s38, %s54
      %p56 = scmp.eq.s32.totalorder %s30, 0
      %p57 = por %p55, %p56
      %s58 = ssub.s32 %s24, %s31
      %p59 = scmp.eq.s32.totalorder %s58, 0
      %s61 = sadd.s32 %s60, 1
      %s62 = scalar_select %p59, %s60, %s61
      %p65 = pneg %p59
      %p66 = scmp.eq.s32.totalorder %s24, 1
      %p67 = por %p65, %p66
      %p68 = scmp.ne.s32.totalorder %s60, %s63
      %p69 = scmp.eq.s32.totalorder %s24, 0
      %p70 = por %p68, %p69
      %p71 = scmp.ne.s32.totalorder %s60, %s63
      %p72 = scmp.eq.s32.totalorder %s29, 1
      %p73 = por %p71, %p72
      %p74 = scmp.ne.s32.totalorder %s63, %s64
      %p75 = scmp.eq.s32.totalorder %s29, 0
      %p76 = por %p74, %p75
      %p77 = scmp.ne.s32.totalorder %s63, %s64
      %p78 = scmp.eq.s32.totalorder %s30, 1
      %p79 = por %p77, %p78
      %p81 = scmp.ne.s32.totalorder %s64, %s80
      %p82 = scmp.eq.s32.totalorder %s30, 0
      %p83 = por %p81, %p82
      %s85 = sadd.s32 %s84, 1
      %p88 = scmp.eq.s32.totalorder %s24, 1
      %p89 = scmp.ne.s32.totalorder %s84, %s86
      %p90 = scmp.eq.s32.totalorder %s24, 0
      %p91 = por %p89, %p90
      %p92 = scmp.ne.s32.totalorder %s84, %s86
      %p93 = scmp.eq.s32.totalorder %s29, 1
      %p94 = por %p92, %p93
      %p95 = scmp.ne.s32.totalorder %s86, %s87
      %p96 = scmp.eq.s32.totalorder %s29, 0
      %p97 = por %p95, %p96
      %p98 = scmp.ne.s32.totalorder %s86, %s87
      %p99 = scmp.eq.s32.totalorder %s30, 1
      %p100 = por %p98, %p99
      %p102 = scmp.ne.s32.totalorder %s87, %s101
      %p103 = scmp.eq.s32.totalorder %s30, 0
      %p104 = por %p102, %p103
      %s106 = sadd.s32 %s105, 1
      %p109 = scmp.eq.s32.totalorder %s24, 1
      %p110 = scmp.ne.s32.totalorder %s105, %s107
      %p111 = scmp.eq.s32.totalorder %s24, 0
      %p112 = por %p110, %p111
      %p113 = scmp.ne.s32.totalorder %s105, %s107
      %p114 = scmp.eq.s32.totalorder %s29, 1
      %p115 = por %p113, %p114
      %p116 = scmp.ne.s32.totalorder %s107, %s108
      %p117 = scmp.eq.s32.totalorder %s29, 0
      %p118 = por %p116, %p117
      %p119 = scmp.ne.s32.totalorder %s107, %s108
      %p120 = scmp.eq.s32.totalorder %s30, 1
      %p121 = por %p119, %p120
      %p123 = scmp.ne.s32.totalorder %s108, %s122
      %p124 = scmp.eq.s32.totalorder %s30, 0
      %p125 = por %p123, %p124
      %s127 = sadd.s32 %s126, 1
      %p130 = scmp.eq.s32.totalorder %s24, 1
      %p131 = scmp.ne.s32.totalorder %s126, %s128
      %p132 = scmp.eq.s32.totalorder %s24, 0
      %p133 = por %p131, %p132
      %p134 = scmp.ne.s32.totalorder %s126, %s128
      %p135 = scmp.eq.s32.totalorder %s29, 1
      %p136 = por %p134, %p135
      %p137 = scmp.ne.s32.totalorder %s128, %s129
      %p138 = scmp.eq.s32.totalorder %s29, 0
      %p139 = por %p137, %p138
      %p140 = scmp.ne.s32.totalorder %s128, %s129
      %p141 = scmp.eq.s32.totalorder %s30, 1
      %p142 = por %p140, %p141
      %p144 = scmp.ne.s32.totalorder %s129, %s143
      %p145 = scmp.eq.s32.totalorder %s30, 0
      %p146 = por %p144, %p145
      %s148 = sadd.s32 %s147, 1
      %p151 = scmp.eq.s32.totalorder %s24, 1
      %p152 = scmp.ne.s32.totalorder %s147, %s149
      %p153 = scmp.eq.s32.totalorder %s24, 0
      %p154 = por %p152, %p153
      %p155 = scmp.ne.s32.totalorder %s147, %s149
      %p156 = scmp.eq.s32.totalorder %s29, 1
      %p157 = por %p155, %p156
      %p158 = scmp.ne.s32.totalorder %s149, %s150
      %p159 = scmp.eq.s32.totalorder %s29, 0
      %p160 = por %p158, %p159
      %p161 = scmp.ne.s32.totalorder %s149, %s150
      %p162 = scmp.eq.s32.totalorder %s30, 1
      %p163 = por %p161, %p162
      %p165 = scmp.ne.s32.totalorder %s150, %s164
      %p166 = scmp.eq.s32.totalorder %s30, 0
      %p167 = por %p165, %p166
      %s169 = sadd.s32 %s168, 1
      %p172 = scmp.eq.s32.totalorder %s24, 1
      %p173 = scmp.ne.s32.totalorder %s168, %s170
      %p174 = scmp.eq.s32.totalorder %s24, 0
      %p175 = por %p173, %p174
      %p176 = scmp.ne.s32.totalorder %s168, %s170
      %p177 = scmp.eq.s32.totalorder %s29, 1
      %p178 = por %p176, %p177
      %p179 = scmp.ne.s32.totalorder %s170, %s171
      %p180 = scmp.eq.s32.totalorder %s29, 0
      %p181 = por %p179, %p180
      %p182 = scmp.ne.s32.totalorder %s170, %s171
      %p183 = scmp.eq.s32.totalorder %s30, 1
      %p184 = por %p182, %p183
      %p186 = scmp.ne.s32.totalorder %s171, %s185
      %p187 = scmp.eq.s32.totalorder %s30, 0
      %p188 = por %p186, %p187
      %s190 = sadd.s32 %s189, 1
      %p193 = scmp.eq.s32.totalorder %s24, 1
      %p194 = scmp.ne.s32.totalorder %s189, %s191
      %p195 = scmp.eq.s32.totalorder %s24, 0
      %p196 = por %p194, %p195
      %p197 = scmp.ne.s32.totalorder %s189, %s191
      %p198 = scmp.eq.s32.totalorder %s29, 1
      %p199 = por %p197, %p198
      %p200 = scmp.ne.s32.totalorder %s191, %s192
      %p201 = scmp.eq.s32.totalorder %s29, 0
      %p202 = por %p200, %p201
      %p203 = scmp.ne.s32.totalorder %s191, %s192
      %p204 = scmp.eq.s32.totalorder %s30, 1
      %p205 = por %p203, %p204
      %p207 = scmp.ne.s32.totalorder %s192, %s206
      %p208 = scmp.eq.s32.totalorder %s30, 0
      %p209 = por %p207, %p208
      %s210 = ssub.s32 %s24, %s31
      %p211 = scmp.eq.s32.totalorder %s210, 0
      %s213 = sadd.s32 %s212, 1
      %s214 = scalar_select %p211, %s212, %s213
      %p217 = pneg %p211
      %p218 = scmp.eq.s32.totalorder %s24, 1
      %p219 = por %p217, %p218
      %p220 = scmp.ne.s32.totalorder %s212, %s215
      %p221 = scmp.eq.s32.totalorder %s24, 0
      %p222 = por %p220, %p221
      %p223 = scmp.ne.s32.totalorder %s212, %s215
      %p224 = scmp.eq.s32.totalorder %s29, 1
      %p225 = por %p223, %p224
      %p226 = scmp.ne.s32.totalorder %s215, %s216
      %p227 = scmp.eq.s32.totalorder %s29, 0
      %p228 = por %p226, %p227
      %p229 = scmp.ne.s32.totalorder %s215, %s216
      %p230 = scmp.eq.s32.totalorder %s30, 1
      %p231 = por %p229, %p230
      %p233 = scmp.ne.s32.totalorder %s216, %s232
      %p234 = scmp.eq.s32.totalorder %s30, 0
      %p235 = por %p233, %p234
      %s236 = ssub.s32 %s24, %s31
      %p237 = scmp.eq.s32.totalorder %s236, 0
      %s239 = sadd.s32 %s238, 1
      %s240 = scalar_select %p237, %s238, %s239
      %p243 = pneg %p237
      %p244 = scmp.eq.s32.totalorder %s24, 1
      %p245 = por %p243, %p244
      %p246 = scmp.ne.s32.totalorder %s238, %s241
      %p247 = scmp.eq.s32.totalorder %s24, 0
      %p248 = por %p246, %p247
      %p249 = scmp.ne.s32.totalorder %s238, %s241
      %p250 = scmp.eq.s32.totalorder %s29, 1
      %p251 = por %p249, %p250
      %p252 = scmp.ne.s32.totalorder %s241, %s242
      %p253 = scmp.eq.s32.totalorder %s29, 0
      %p254 = por %p252, %p253
      %p255 = scmp.ne.s32.totalorder %s241, %s242
      %p256 = scmp.eq.s32.totalorder %s30, 1
      %p257 = por %p255, %p256
      %p259 = scmp.ne.s32.totalorder %s242, %s258
      %p260 = scmp.eq.s32.totalorder %s30, 0
      %p261 = por %p259, %p260
      %s262 = ssub.s32 %s24, %s31
      %p263 = scmp.eq.s32.totalorder %s262, 0
      %s265 = sadd.s32 %s264, 1
      %s266 = scalar_select %p263, %s264, %s265
      %p269 = pneg %p263
      %p270 = scmp.eq.s32.totalorder %s24, 1
      %p271 = por %p269, %p270
      %p272 = scmp.ne.s32.totalorder %s264, %s267
      %p273 = scmp.eq.s32.totalorder %s24, 0
      %p274 = por %p272, %p273
      %p275 = scmp.ne.s32.totalorder %s264, %s267
      %p276 = scmp.eq.s32.totalorder %s29, 1
      %p277 = por %p275, %p276
      %p278 = scmp.ne.s32.totalorder %s267, %s268
      %p279 = scmp.eq.s32.totalorder %s29, 0
      %p280 = por %p278, %p279
      %p281 = scmp.ne.s32.totalorder %s267, %s268
      %p282 = scmp.eq.s32.totalorder %s30, 1
      %p283 = por %p281, %p282
      %p285 = scmp.ne.s32.totalorder %s268, %s284
      %p286 = scmp.eq.s32.totalorder %s30, 0
      %p287 = por %p285, %p286
      %p288 = scmp.le.s32.totalorder 1, %s24
      %p289 = scmp.lt.s32.totalorder %s24, 3
      %p290 = pnand %p288, %p289
      %p291 = pneg %p290
      // Predicated region
      $region9: #{tpu_custom_call.1} parent=5 // pred_check
        _
      $region10: #{tpu_custom_call.1} parent=5 // pred_check_branch
        %293 = sbr.rel (%p290) target = $region12
      $region11: #{tpu_custom_call.1} parent=5 // pred_region
        %s294 = ssub.s32 %s24, 1
        // Predicated region
        $region13: #{tpu_custom_call.1} parent=11 // pred_check
          %p295 = pneg %p97
        $region14: #{tpu_custom_call.1} parent=11 // pred_check_branch
          %297 = sbr.rel (%p295) target = $region16
        $region15: #{tpu_custom_call.1} parent=11 // pred_region
          %s299 = ssub.s32 64, 64
          %300 = vsyncadd [#allocation10], %s299
          %s302 = sshll.u32 [#allocation9], 4
          %s303 = int_to_ptr.vmem [resolvable:$true] %s302
          %305 = dma.hbm_to_vmem [thread:$0]  %s2, 64, %s303, [#allocation10]
        $region16: #{tpu_custom_call.1} parent=11 // pred_fallthru
          _
        // Predicated region
        $region17: #{tpu_custom_call.1} parent=11 // pred_check
          %p306 = pneg %p118
        $region18: #{tpu_custom_call.1} parent=11 // pred_check_branch
          %308 = sbr.rel (%p306) target = $region20
        $region19: #{tpu_custom_call.1} parent=11 // pred_region
          _
        $region20: #{tpu_custom_call.1} parent=11 // pred_fallthru
          _
        // Predicated region
        $region21: #{tpu_custom_call.1} parent=11 // pred_check
          %p309 = pneg %p139
        $region22: #{tpu_custom_call.1} parent=11 // pred_check_branch
          %311 = sbr.rel (%p309) target = $region24
        $region23: #{tpu_custom_call.1} parent=11 // pred_region
          _
        $region24: #{tpu_custom_call.1} parent=11 // pred_fallthru
          _
        // Predicated region
        $region25: #{tpu_custom_call.1} parent=11 // pred_check
          %p312 = pneg %p160
        $region26: #{tpu_custom_call.1} parent=11 // pred_check_branch
          %314 = sbr.rel (%p312) target = $region28
        $region27: #{tpu_custom_call.1} parent=11 // pred_region
          _
        $region28: #{tpu_custom_call.1} parent=11 // pred_fallthru
          _
        // Predicated region
        $region29: #{tpu_custom_call.1} parent=11 // pred_check
          %p315 = pneg %p181
        $region30: #{tpu_custom_call.1} parent=11 // pred_check_branch
          %317 = sbr.rel (%p315) target = $region32
        $region31: #{tpu_custom_call.1} parent=11 // pred_region
          %s319 = ssub.s32 128, 128
          %320 = vsyncadd [#allocation10], %s319
          %s321 = sshll.u32 [#allocation11], 4
          %s322 = int_to_ptr.vmem [resolvable:$true] %s321
          %327 = dma.hbm_to_vmem [thread:$0]  %s6, 128, %s322, [#allocation10], 64, 64, 4
        $region32: #{tpu_custom_call.1} parent=11 // pred_fallthru
          _
        // Predicated region
        $region33: #{tpu_custom_call.1} parent=11 // pred_check
          %p328 = pneg %p202
        $region34: #{tpu_custom_call.1} parent=11 // pred_check_branch
          %330 = sbr.rel (%p328) target = $region36
        $region35: #{tpu_custom_call.1} parent=11 // pred_region
          _
        $region36: #{tpu_custom_call.1} parent=11 // pred_fallthru
          _
      $region12: #{tpu_custom_call.1} parent=5 // pred_fallthru
        _
      %p331 = scmp.lt.s32.totalorder %s24, 2
      // Predicated region
      $region37: #{tpu_custom_call.1} parent=5 // pred_check
        %p332 = pneg %p331
      $region38: #{tpu_custom_call.1} parent=5 // pred_check_branch
        %334 = sbr.rel (%p332) target = $region40
      $region39: #{tpu_custom_call.1} parent=5 // pred_region
        // Predicated region
        $region41: #{tpu_custom_call.1} parent=39 // pred_check
          %p335 = pneg %p44
        $region42: #{tpu_custom_call.1} parent=39 // pred_check_branch
          %337 = sbr.rel (%p335) target = $region44
        $region43: #{tpu_custom_call.1} parent=39 // pred_region
          %p338 = scmp.lt.s32.totalorder %s24, 1
          %s339 = scalar_select %p338, %s24, 1
          %s340 = smul.addr %s339, 2
          %s341 = smul.addr %s340, 8
          %s342 = scalar_lea.vmem %s0, %s341
        $region44: #{tpu_custom_call.1} parent=39 // pred_fallthru
          _
        // Predicated region
        $region45: #{tpu_custom_call.1} parent=39 // pred_check
          %p343 = pneg %p70
        $region46: #{tpu_custom_call.1} parent=39 // pred_check_branch
          %345 = sbr.rel (%p343) target = $region48
        $region47: #{tpu_custom_call.1} parent=39 // pred_region
          %s346 = sand.u32 %s60, 1
          %s347 = scalar_lea.sflag [#allocation7], %s346
          %s348 = sand.u32 %s60, 1
          %s349 = smul.addr %s348, 16
          %s350 = scalar_lea.vmem [#allocation6], %s349
          %s352 = ssub.s32 256, 256
          %353 = vsyncadd %s347, %s352
          %s354 = smul.addr %s24, 2
          %s355 = smul.addr %s354, 128
          %s356 = scalar_lea.hbm %s1, %s355
          %s358 = sshll.u32 %s350, 4
          %s359 = int_to_ptr.vmem [resolvable:$true] %s358
          %361 = dma.hbm_to_vmem [thread:$0]  %s356, 256, %s359, %s347
        $region48: #{tpu_custom_call.1} parent=39 // pred_fallthru
          _
      $region40: #{tpu_custom_call.1} parent=5 // pred_fallthru
        _
      %p362 = scmp.le.s32.totalorder 1, %s24
      %p363 = scmp.lt.s32.totalorder %s24, 3
      %p364 = pnand %p362, %p363
      %p365 = pneg %p364
      // Predicated region
      $region49: #{tpu_custom_call.1} parent=5 // pred_check
        _
      $region50: #{tpu_custom_call.1} parent=5 // pred_check_branch
        %367 = sbr.rel (%p364) target = $region52
      $region51: #{tpu_custom_call.1} parent=5 // pred_region
        %s368 = ssub.s32 %s24, 1
        %s369 = sand.u32 %s63, 1
        %s370 = scalar_lea.sflag [#allocation7], %s369
        %s371 = sand.u32 %s63, 1
        %s372 = smul.addr %s371, 16
        %s373 = scalar_lea.vmem [#allocation6], %s372
        // Predicated region
        $region53: #{tpu_custom_call.1} parent=51 // pred_check
          %p374 = pneg %p76
        $region54: #{tpu_custom_call.1} parent=51 // pred_check_branch
          %376 = sbr.rel (%p374) target = $region56
        $region55: #{tpu_custom_call.1} parent=51 // pred_region
          %377 = dma.done %s370, 256
        $region56: #{tpu_custom_call.1} parent=51 // pred_fallthru
          _
        // Predicated region
        $region57: #{tpu_custom_call.1} parent=51 // pred_check
          %p378 = pneg %p97
        $region58: #{tpu_custom_call.1} parent=51 // pred_check_branch
          %380 = sbr.rel (%p378) target = $region60
        $region59: #{tpu_custom_call.1} parent=51 // pred_region
          %381 = dma.done [#allocation10], 64
        $region60: #{tpu_custom_call.1} parent=51 // pred_fallthru
          _
        // Predicated region
        $region61: #{tpu_custom_call.1} parent=51 // pred_check
          %p382 = pneg %p181
        $region62: #{tpu_custom_call.1} parent=51 // pred_check_branch
          %384 = sbr.rel (%p382) target = $region64
        $region63: #{tpu_custom_call.1} parent=51 // pred_region
          %385 = dma.done [#allocation10], 128
        $region64: #{tpu_custom_call.1} parent=51 // pred_fallthru
          _
        %p386 = scmp.lt.s32.totalorder %s29, 1
        %s387 = scalar_select %p386, %s29, 1
        %s388 = smul.addr %s387, 2
        %s389 = smul.addr %s388, 8
        %s390 = scalar_lea.vmem %s0, %s389
        %p391 = pneg %p50
        %p392 = pneg %p47
        %s393 = sand.u32 %s63, 1
        %s394 = scalar_lea.sflag [#allocation7], %s393
        %s395 = sand.u32 %s63, 1
        %s396 = smul.addr %s395, 16
        %s397 = scalar_lea.vmem [#allocation6], %s396
        %p398 = pneg %p76
        %p399 = pneg %p73
        %p400 = pneg %p97
        %p401 = pneg %p94
        %p402 = pneg %p118
        %p403 = pneg %p115
        %p404 = pneg %p139
        %p405 = pneg %p136
        %p406 = pneg %p160
        %p407 = pneg %p157
        %p408 = pneg %p181
        %p409 = pneg %p178
        %p410 = pneg %p202
        %p411 = pneg %p199
        %p412 = pneg %p228
        %p413 = pneg %p225
        %s414 = sand.u32 %s215, 1
        %s415 = scalar_lea.sflag [#allocation8], %s414
        %s416 = sand.u32 %s215, 1
        %s417 = smul.addr %s416, 16
        %s418 = scalar_lea.vmem [#allocation12], %s417
        %p419 = pneg %p254
        %p420 = pneg %p251
        %p421 = scmp.lt.s32.totalorder %s29, 1
        %s422 = scalar_select %p421, %s29, 1
        %s423 = smul.addr %s422, 2
        %s424 = smul.addr %s423, 4
        %s425 = scalar_lea.vmem %s9, %s424
        %p426 = pneg %p280
        %p427 = pneg %p277
        %p428 = scmp.lt.s32.totalorder %s29, 1
        %s429 = scalar_select %p428, %s29, 1
        %s430 = smul.addr %s429, 4
        %s431 = smul.addr %s430, 8
        %s432 = scalar_lea.vmem %s10, %s431
        %p433 = scmp.lt.s32.totalorder %s29, 1
        %s434 = scalar_select %p433, %s29, 1
        %s435 = smul.addr %s434, 2
        %s436 = smul.addr %s435, 8
        %s437 = scalar_lea.vmem %s0, %s436
        %p438 = scmp.lt.s32.totalorder %s29, 1
        %s439 = scalar_select %p438, %s29, 1
        %s440 = smul.addr %s439, 2
        %s441 = smul.addr %s440, 4
        %s442 = scalar_lea.vmem %s9, %s441
        %p443 = scmp.lt.s32.totalorder %s29, 1
        %s444 = scalar_select %p443, %s29, 1
        %s445 = smul.addr %s444, 4
        %s446 = smul.addr %s445, 8
        %s447 = scalar_lea.vmem %s10, %s446
        %v451 = vlaneseq
        %v452 = vand.u32 %v451, 127
        %v453 = vadd.s32 %v452, 128
        %v454 = vadd.s32 %v452, 256
        %v455 = vadd.s32 %v452, 384
        %v456 = vand.u32 %v452, 15
        %v457 = vand.u32 %v453, 15
        %v458 = vand.u32 %v454, 15
        %v459 = vand.u32 %v455, 15
        %v460 = vand.u32 %v452, 255
        %v461 = vand.u32 %v453, 255
        %v462 = vand.u32 %v454, 255
        %v463 = vand.u32 %v455, 255
        %vm464 = vcmp.ge.s32.totalorder %v456, 1
        %vm465 = vcmp.ge.s32.totalorder %v457, 1
        %vm466 = vcmp.ge.s32.totalorder %v458, 1
        %vm467 = vcmp.ge.s32.totalorder %v459, 1
        %vm468 = vcmp.le.s32.totalorder %v456, 14
        %vm469 = vcmp.le.s32.totalorder %v457, 14
        %vm470 = vcmp.le.s32.totalorder %v458, 14
        %vm471 = vcmp.le.s32.totalorder %v459, 14
        %vm472 = vcmp.ge.s32.totalorder %v460, 16
        %vm473 = vcmp.ge.s32.totalorder %v461, 16
        %vm474 = vcmp.ge.s32.totalorder %v462, 16
        %vm475 = vcmp.ge.s32.totalorder %v463, 16
        %vm476 = vcmp.lt.s32.totalorder %v460, 240
        %vm477 = vcmp.lt.s32.totalorder %v461, 240
        %vm478 = vcmp.lt.s32.totalorder %v462, 240
        %vm479 = vcmp.lt.s32.totalorder %v463, 240
        %480 = vst [vmem:[#allocation2] sm:$0xf] 0
        %481 = vst [vmem:[#allocation2 + $0x14] sm:$0xf] 0
        %v482 = vld [vmem:[%s437] sm:$0xff]
        %v483 = vld [vmem:[%s437 + $0x8] sm:$0xff]
        %v484 = vpack.c.bf16 %v482, %v482
        %v485 = vpack.c.bf16 %v483, %v483
        %v488 = vunpack.c.l.b16 %v484
        %v489 = vunpack.c.l.b16 %v485
        %v490 = vpack.c.b16 %v489, %v488
        %492 = vst [vmem:[#allocation2 + $0x4] sm:$0xff] %v490
        %v493 = vld [vmem:[%s373] sm:$0xff]
        %v494 = vld [vmem:[%s373 + $0x8] sm:$0xff]
        %v495 = vpack.c.bf16 %v493, %v493
        %v496 = vpack.c.bf16 %v494, %v494
        %v499 = vunpack.c.l.b16 %v495
        %v500 = vunpack.c.l.b16 %v496
        %v501 = vpack.c.b16 %v500, %v499
        %503 = vst [vmem:[#allocation2 + $0xc] sm:$0xff] %v501
        %v504 = vld [vmem:[#allocation2] sm:$0xff]
        %v505 = vld [vmem:[#allocation2 + $0x8] sm:$0xff]
        %v506 = vld [vmem:[#allocation2 + $0x10] sm:$0xff]
        %vm507 = vmand %vm472, %vm464
        %vm508 = vmand %vm473, %vm465
        %vm509 = vmand %vm474, %vm466
        %vm510 = vmand %vm475, %vm467
        %v511 = vsel %vm507, 1, 0
        %v512 = vsel %vm508, 1, 0
        %v513 = vsel %vm509, 1, 0
        %v514 = vsel %vm510, 1, 0
        %vm515 = vcmp.eq.s32.totalorder %v511, 1
        %vm516 = vcmp.eq.s32.totalorder %v512, 1
        %vm517 = vcmp.eq.s32.totalorder %v513, 1
        %vm518 = vcmp.eq.s32.totalorder %v514, 1
        %vm519 = vmpackc.low %vm516, %vm515
        %vm520 = vmpackc.low %vm518, %vm517
        %v521 = vsel %vm519, 65537, 0
        %v522 = vsel %vm520, 65537, 0
        %523 = vrot.lane.b32.xlu0 %v521, 111
        %v524 = vpop.permute.xlu0 %523
        %525 = vrot.lane.b32.xlu0 %v522, 111
        %v526 = vpop.permute.xlu0 %525
        %v527 = vrot.slane %v524, 4
        %v528 = vrot.slane %v526, 4
        %vm529 = vcmask 908288
        %v530 = vsel %vm529, %v527, %v524
        %vm531 = vcmask 1043456
        %v532 = vsel %vm531, %v527, %v528
        %v533 = vsel %vm529, %v532, %v526
        %vm534 = vcmp.ne.s16.totalorder %v530, 0
        %vm535 = vcmp.ne.s16.totalorder %v533, 0
        %vm536 = vcmp.ne.s16.totalorder %v528, 0
        %v537 = vsel %vm534, %v504, 0
        %v538 = vsel %vm535, %v505, 0
        %v539 = vsel %vm536, %v506, 0
        %543 = vrot.lane.b32.xlu0 %v537, 17
        %v544 = vpop.permute.xlu0 %543
        %545 = vrot.lane.b32.xlu0 %v538, 17
        %v546 = vpop.permute.xlu0 %545
        %547 = vrot.lane.b32.xlu0 %v539, 17
        %v548 = vpop.permute.xlu0 %547
        %v549 = vrot.slane %v544, 4
        %v550 = vrot.slane %v546, 4
        %v551 = vrot.slane %v548, 4
        %v552 = vsel %vm531, %v549, %v550
        %vm553 = vcmask 138240
        %v554 = vsel %vm553, %v544, %v552
        %v555 = vsel %vm531, %v550, %v551
        %v556 = vsel %vm553, %v546, %v555
        %559 = vst [vmem:[#allocation3] sm:$0xff] %v554
        %560 = vst [vmem:[#allocation3 + $0x8] sm:$0xff] %v556
        %v561 = vsel %vm472, 1, 0
        %v562 = vsel %vm473, 1, 0
        %v563 = vsel %vm474, 1, 0
        %v564 = vsel %vm475, 1, 0
        %vm565 = vcmp.eq.s32.totalorder %v561, 1
        %vm566 = vcmp.eq.s32.totalorder %v562, 1
        %vm567 = vcmp.eq.s32.totalorder %v563, 1
        %vm568 = vcmp.eq.s32.totalorder %v564, 1
        %vm569 = vmpackc.low %vm566, %vm565
        %vm570 = vmpackc.low %vm568, %vm567
        %v571 = vsel %vm569, 65537, 0
        %v572 = vsel %vm570, 65537, 0
        %573 = vrot.lane.b32.xlu0 %v571, 112
        %v574 = vpop.permute.xlu0 %573
        %575 = vrot.lane.b32.xlu0 %v572, 112
        %v576 = vpop.permute.xlu0 %575
        %v577 = vrot.slane %v574, 4
        %v578 = vrot.slane %v576, 4
        %vm579 = vcmask 916480
        %v580 = vsel %vm579, %v577, %v574
        %v581 = vsel %vm531, %v577, %v578
        %v582 = vsel %vm579, %v581, %v576
        %vm583 = vcmp.ne.s16.totalorder %v580, 0
        %vm584 = vcmp.ne.s16.totalorder %v582, 0
        %vm585 = vcmp.ne.s16.totalorder %v578, 0
        %v586 = vsel %vm583, %v504, 0
        %v587 = vsel %vm584, %v505, 0
        %v588 = vsel %vm585, %v506, 0
        %592 = vrot.lane.b32.xlu0 %v586, 16
        %v593 = vpop.permute.xlu0 %592
        %594 = vrot.lane.b32.xlu0 %v587, 16
        %v595 = vpop.permute.xlu0 %594
        %596 = vrot.lane.b32.xlu0 %v588, 16
        %v597 = vpop.permute.xlu0 %596
        %v598 = vrot.slane %v593, 4
        %v599 = vrot.slane %v595, 4
        %v600 = vrot.slane %v597, 4
        %v601 = vsel %vm531, %v598, %v599
        %vm602 = vcmask 130048
        %v603 = vsel %vm602, %v593, %v601
        %v604 = vsel %vm531, %v599, %v600
        %v605 = vsel %vm602, %v595, %v604
        %608 = vst [vmem:[#allocation3 + $0x10] sm:$0xff] %v603
        %609 = vst [vmem:[#allocation3 + $0x18] sm:$0xff] %v605
        %vm610 = vmand %vm472, %vm468
        %vm611 = vmand %vm473, %vm469
        %vm612 = vmand %vm474, %vm470
        %vm613 = vmand %vm475, %vm471
        %v614 = vsel %vm610, 1, 0
        %v615 = vsel %vm611, 1, 0
        %v616 = vsel %vm612, 1, 0
        %v617 = vsel %vm613, 1, 0
        %vm618 = vcmp.eq.s32.totalorder %v614, 1
        %vm619 = vcmp.eq.s32.totalorder %v615, 1
        %vm620 = vcmp.eq.s32.totalorder %v616, 1
        %vm621 = vcmp.eq.s32.totalorder %v617, 1
        %vm622 = vmpackc.low %vm619, %vm618
        %vm623 = vmpackc.low %vm621, %vm620
        %v624 = vsel %vm622, 65537, 0
        %v625 = vsel %vm623, 65537, 0
        %626 = vrot.lane.b32.xlu0 %v624, 113
        %v627 = vpop.permute.xlu0 %626
        %628 = vrot.lane.b32.xlu0 %v625, 113
        %v629 = vpop.permute.xlu0 %628
        %v630 = vrot.slane %v627, 4
        %v631 = vrot.slane %v629, 4
        %vm632 = vcmask 924672
        %v633 = vsel %vm632, %v630, %v627
        %v634 = vsel %vm531, %v630, %v631
        %v635 = vsel %vm632, %v634, %v629
        %vm636 = vcmp.ne.s16.totalorder %v633, 0
        %vm637 = vcmp.ne.s16.totalorder %v635, 0
        %vm638 = vcmp.ne.s16.totalorder %v631, 0
        %v639 = vsel %vm636, %v504, 0
        %v640 = vsel %vm637, %v505, 0
        %v641 = vsel %vm638, %v506, 0
        %645 = vrot.lane.b32.xlu0 %v639, 15
        %v646 = vpop.permute.xlu0 %645
        %647 = vrot.lane.b32.xlu0 %v640, 15
        %v648 = vpop.permute.xlu0 %647
        %649 = vrot.lane.b32.xlu0 %v641, 15
        %v650 = vpop.permute.xlu0 %649
        %v651 = vrot.slane %v646, 4
        %v652 = vrot.slane %v648, 4
        %v653 = vrot.slane %v650, 4
        %v654 = vsel %vm531, %v651, %v652
        %vm655 = vcmask 121856
        %v656 = vsel %vm655, %v646, %v654
        %v657 = vsel %vm531, %v652, %v653
        %v658 = vsel %vm655, %v648, %v657
        %661 = vst [vmem:[#allocation3 + $0x20] sm:$0xff] %v656
        %662 = vst [vmem:[#allocation3 + $0x28] sm:$0xff] %v658
        %v663 = vsel %vm464, 1, 0
        %v664 = vsel %vm465, 1, 0
        %v665 = vsel %vm466, 1, 0
        %v666 = vsel %vm467, 1, 0
        %vm667 = vcmp.eq.s32.totalorder %v663, 1
        %vm668 = vcmp.eq.s32.totalorder %v664, 1
        %vm669 = vcmp.eq.s32.totalorder %v665, 1
        %vm670 = vcmp.eq.s32.totalorder %v666, 1
        %vm671 = vmpackc.low %vm668, %vm667
        %vm672 = vmpackc.low %vm670, %vm669
        %v673 = vsel %vm671, 65537, 0
        %v674 = vsel %vm672, 65537, 0
        %675 = vrot.lane.b32.xlu0 %v673, 127
        %v676 = vpop.permute.xlu0 %675
        %677 = vrot.lane.b32.xlu0 %v674, 127
        %v678 = vpop.permute.xlu0 %677
        %v679 = vrot.slane %v676, 4
        %v680 = vrot.slane %v678, 4
        %vm681 = vcmask 1039360
        %v682 = vsel %vm681, %v679, %v676
        %v683 = vsel %vm531, %v679, %v680
        %v684 = vsel %vm681, %v683, %v678
        %vm685 = vcmp.ne.s16.totalorder %v682, 0
        %vm686 = vcmp.ne.s16.totalorder %v684, 0
        %vm687 = vcmp.ne.s16.totalorder %v680, 0
        %v688 = vsel %vm685, %v504, 0
        %v689 = vsel %vm686, %v505, 0
        %v690 = vsel %vm687, %v506, 0
        %694 = vrot.lane.b32.xlu0 %v688, 1
        %v695 = vpop.permute.xlu0 %694
        %696 = vrot.lane.b32.xlu0 %v689, 1
        %v697 = vpop.permute.xlu0 %696
        %698 = vrot.lane.b32.xlu0 %v690, 1
        %v699 = vpop.permute.xlu0 %698
        %v700 = vrot.slane %v695, 4
        %v701 = vrot.slane %v697, 4
        %v702 = vrot.slane %v699, 4
        %v703 = vsel %vm531, %v700, %v701
        %vm704 = vcmask 7168
        %v705 = vsel %vm704, %v695, %v703
        %v706 = vsel %vm531, %v701, %v702
        %v707 = vsel %vm704, %v697, %v706
        %710 = vst [vmem:[#allocation3 + $0x30] sm:$0xff] %v705
        %711 = vst [vmem:[#allocation3 + $0x38] sm:$0xff] %v707
        %v715 = vrot.slane %v504, 4
        %v716 = vrot.slane %v505, 4
        %v717 = vrot.slane %v506, 4
        %v718 = vsel %vm531, %v715, %v716
        %v719 = vsel %vm531, %v716, %v717
        %722 = vst [vmem:[#allocation3 + $0x40] sm:$0xff] %v718
        %723 = vst [vmem:[#allocation3 + $0x48] sm:$0xff] %v719
        %v724 = vsel %vm468, 1, 0
        %v725 = vsel %vm469, 1, 0
        %v726 = vsel %vm470, 1, 0
        %v727 = vsel %vm471, 1, 0
        %vm728 = vcmp.eq.s32.totalorder %v724, 1
        %vm729 = vcmp.eq.s32.totalorder %v725, 1
        %vm730 = vcmp.eq.s32.totalorder %v726, 1
        %vm731 = vcmp.eq.s32.totalorder %v727, 1
        %vm732 = vmpackc.low %vm729, %vm728
        %vm733 = vmpackc.low %vm731, %vm730
        %734 = vrot.lane.b32.xlu0 %v504, 127
        %v735 = vpop.permute.xlu0 %734
        %736 = vrot.lane.b32.xlu0 %v505, 127
        %v737 = vpop.permute.xlu0 %736
        %738 = vrot.lane.b32.xlu0 %v506, 127
        %v739 = vpop.permute.xlu0 %738
        %v740 = vrot.slane %v735, 4
        %v741 = vrot.slane %v737, 4
        %v742 = vrot.slane %v739, 4
        %v743 = vsel %vm531, %v740, %v741
        %v744 = vsel %vm681, %v743, %v737
        %v745 = vsel %vm531, %v741, %v742
        %v746 = vsel %vm681, %v745, %v739
        %v749 = vsel %vm732, %v744, 0
        %v750 = vsel %vm733, %v746, 0
        %751 = vst [vmem:[#allocation3 + $0x50] sm:$0xff] %v749
        %752 = vst [vmem:[#allocation3 + $0x58] sm:$0xff] %v750
        %vm753 = vmand %vm476, %vm464
        %vm754 = vmand %vm477, %vm465
        %vm755 = vmand %vm478, %vm466
        %vm756 = vmand %vm479, %vm467
        %v757 = vsel %vm753, 1, 0
        %v758 = vsel %vm754, 1, 0
        %v759 = vsel %vm755, 1, 0
        %v760 = vsel %vm756, 1, 0
        %vm761 = vcmp.eq.s32.totalorder %v757, 1
        %vm762 = vcmp.eq.s32.totalorder %v758, 1
        %vm763 = vcmp.eq.s32.totalorder %v759, 1
        %vm764 = vcmp.eq.s32.totalorder %v760, 1
        %vm765 = vmpackc.low %vm762, %vm761
        %vm766 = vmpackc.low %vm764, %vm763
        %767 = vrot.lane.b32.xlu0 %v504, 113
        %v768 = vpop.permute.xlu0 %767
        %769 = vrot.lane.b32.xlu0 %v505, 113
        %v770 = vpop.permute.xlu0 %769
        %771 = vrot.lane.b32.xlu0 %v506, 113
        %v772 = vpop.permute.xlu0 %771
        %v773 = vrot.slane %v768, 4
        %v774 = vrot.slane %v770, 4
        %v775 = vrot.slane %v772, 4
        %v776 = vsel %vm531, %v773, %v774
        %v777 = vsel %vm632, %v776, %v770
        %v778 = vsel %vm531, %v774, %v775
        %v779 = vsel %vm632, %v778, %v772
        %v782 = vsel %vm765, %v777, 0
        %v783 = vsel %vm766, %v779, 0
        %784 = vst [vmem:[#allocation3 + $0x60] sm:$0xff] %v782
        %785 = vst [vmem:[#allocation3 + $0x68] sm:$0xff] %v783
        %v786 = vsel %vm476, 1, 0
        %v787 = vsel %vm477, 1, 0
        %v788 = vsel %vm478, 1, 0
        %v789 = vsel %vm479, 1, 0
        %vm790 = vcmp.eq.s32.totalorder %v786, 1
        %vm791 = vcmp.eq.s32.totalorder %v787, 1
        %vm792 = vcmp.eq.s32.totalorder %v788, 1
        %vm793 = vcmp.eq.s32.totalorder %v789, 1
        %vm794 = vmpackc.low %vm791, %vm790
        %vm795 = vmpackc.low %vm793, %vm792
        %796 = vrot.lane.b32.xlu0 %v504, 112
        %v797 = vpop.permute.xlu0 %796
        %798 = vrot.lane.b32.xlu0 %v505, 112
        %v799 = vpop.permute.xlu0 %798
        %800 = vrot.lane.b32.xlu0 %v506, 112
        %v801 = vpop.permute.xlu0 %800
        %v802 = vrot.slane %v797, 4
        %v803 = vrot.slane %v799, 4
        %v804 = vrot.slane %v801, 4
        %v805 = vsel %vm531, %v802, %v803
        %v806 = vsel %vm579, %v805, %v799
        %v807 = vsel %vm531, %v803, %v804
        %v808 = vsel %vm579, %v807, %v801
        %v811 = vsel %vm794, %v806, 0
        %v812 = vsel %vm795, %v808, 0
        %813 = vst [vmem:[#allocation3 + $0x70] sm:$0xff] %v811
        %814 = vst [vmem:[#allocation3 + $0x78] sm:$0xff] %v812
        %vm815 = vmand %vm476, %vm468
        %vm816 = vmand %vm477, %vm469
        %vm817 = vmand %vm478, %vm470
        %vm818 = vmand %vm479, %vm471
        %v819 = vsel %vm815, 1, 0
        %v820 = vsel %vm816, 1, 0
        %v821 = vsel %vm817, 1, 0
        %v822 = vsel %vm818, 1, 0
        %vm823 = vcmp.eq.s32.totalorder %v819, 1
        %vm824 = vcmp.eq.s32.totalorder %v820, 1
        %vm825 = vcmp.eq.s32.totalorder %v821, 1
        %vm826 = vcmp.eq.s32.totalorder %v822, 1
        %vm827 = vmpackc.low %vm824, %vm823
        %vm828 = vmpackc.low %vm826, %vm825
        %829 = vrot.lane.b32.xlu0 %v504, 111
        %v830 = vpop.permute.xlu0 %829
        %831 = vrot.lane.b32.xlu0 %v505, 111
        %v832 = vpop.permute.xlu0 %831
        %833 = vrot.lane.b32.xlu0 %v506, 111
        %v834 = vpop.permute.xlu0 %833
        %v835 = vrot.slane %v830, 4
        %v836 = vrot.slane %v832, 4
        %v837 = vrot.slane %v834, 4
        %v838 = vsel %vm531, %v835, %v836
        %v839 = vsel %vm529, %v838, %v832
        %v840 = vsel %vm531, %v836, %v837
        %v841 = vsel %vm529, %v840, %v834
        %v844 = vsel %vm827, %v839, 0
        %v845 = vsel %vm828, %v841, 0
        %846 = vst [vmem:[#allocation3 + $0x80] sm:$0xff] %v844
        %847 = vst [vmem:[#allocation3 + $0x88] sm:$0xff] %v845
        %v848 = vld [vmem:[#allocation9] sm:$0xf]
        %v849 = vld [vmem:[#allocation3] sm:$0xff]
        %v850 = vld [vmem:[#allocation3 + $0x8] sm:$0xff]
        %v851 = vld [vmem:[#allocation3 + $0x10] sm:$0xff]
        %v852 = vld [vmem:[#allocation3 + $0x18] sm:$0xff]
        %v853 = vld [vmem:[#allocation3 + $0x20] sm:$0xff]
        %v854 = vld [vmem:[#allocation3 + $0x28] sm:$0xff]
        %v855 = vld [vmem:[#allocation3 + $0x30] sm:$0xff]
        %v856 = vld [vmem:[#allocation3 + $0x38] sm:$0xff]
        %v857 = vld [vmem:[#allocation3 + $0x40] sm:$0xff]
        %v858 = vld [vmem:[#allocation3 + $0x48] sm:$0xff]
        %v859 = vld [vmem:[#allocation3 + $0x50] sm:$0xff]
        %v860 = vld [vmem:[#allocation3 + $0x58] sm:$0xff]
        %v861 = vld [vmem:[#allocation3 + $0x60] sm:$0xff]
        %v862 = vld [vmem:[#allocation3 + $0x68] sm:$0xff]
        %v863 = vld [vmem:[#allocation3 + $0x70] sm:$0xff]
        %v864 = vld [vmem:[#allocation3 + $0x78] sm:$0xff]
        %v865 = vld [vmem:[#allocation3 + $0x80] sm:$0xff]
        %v866 = vld [vmem:[#allocation3 + $0x88] sm:$0xff]
        %v867 = vld [vmem:[%s3] sm:$0xff]
        %869 = vset.pattern.permute.xlu0 0
        %870 = vperm.xlu0 %869, %v867
        %v871 = vpop.permute.xlu0 %870
        %v891 = vunpack.c.l.b16 %v849
        %v892 = vunpack.c.h.b16 %v849
        %v893 = vunpack.c.l.b16 %v850
        %v894 = vunpack.c.h.b16 %v850
        %v895 = vunpack.c.l.b16 %v851
        %v896 = vunpack.c.h.b16 %v851
        %v897 = vunpack.c.l.b16 %v852
        %v898 = vunpack.c.h.b16 %v852
        %v899 = vunpack.c.l.b16 %v853
        %v900 = vunpack.c.h.b16 %v853
        %v901 = vunpack.c.l.b16 %v854
        %v902 = vunpack.c.h.b16 %v854
        %v903 = vunpack.c.l.b16 %v855
        %v904 = vunpack.c.h.b16 %v855
        %v905 = vunpack.c.l.b16 %v856
        %v906 = vunpack.c.h.b16 %v856
        %v907 = vunpack.c.l.b16 %v857
        %v908 = vunpack.c.h.b16 %v857
        %v909 = vunpack.c.l.b16 %v858
        %v910 = vunpack.c.h.b16 %v858
        %v911 = vunpack.c.l.b16 %v859
        %v912 = vunpack.c.h.b16 %v859
        %v913 = vunpack.c.l.b16 %v860
        %v914 = vunpack.c.h.b16 %v860
        %v915 = vunpack.c.l.b16 %v861
        %v916 = vunpack.c.h.b16 %v861
        %v917 = vunpack.c.l.b16 %v862
        %v918 = vunpack.c.h.b16 %v862
        %v919 = vunpack.c.l.b16 %v863
        %v920 = vunpack.c.h.b16 %v863
        %v921 = vunpack.c.l.b16 %v864
        %v922 = vunpack.c.h.b16 %v864
        %v923 = vunpack.c.l.b16 %v865
        %v924 = vunpack.c.h.b16 %v865
        %v925 = vunpack.c.l.b16 %v866
        %v926 = vunpack.c.h.b16 %v866
        %v927 = vpack.c.b16 %v895, %v891
        %v928 = vpack.c.b16 %v896, %v892
        %v929 = vpack.c.b16 %v897, %v893
        %v930 = vpack.c.b16 %v898, %v894
        %v931 = vpack.c.b16 %v903, %v899
        %v932 = vpack.c.b16 %v904, %v900
        %v933 = vpack.c.b16 %v905, %v901
        %v934 = vpack.c.b16 %v906, %v902
        %v935 = vpack.c.b16 %v911, %v907
        %v936 = vpack.c.b16 %v912, %v908
        %v937 = vpack.c.b16 %v913, %v909
        %v938 = vpack.c.b16 %v914, %v910
        %v939 = vpack.c.b16 %v919, %v915
        %v940 = vpack.c.b16 %v920, %v916
        %v941 = vpack.c.b16 %v921, %v917
        %v942 = vpack.c.b16 %v922, %v918
        %v943 = vpack.c.b16 %v923, %v923
        %v944 = vpack.c.b16 %v924, %v924
        %v945 = vpack.c.b16 %v925, %v925
        %v946 = vpack.c.b16 %v926, %v926
        %vm963 = vcmask 588800
        %v965 = vsel %vm963, %v848, 0
        %vm967 = vcmask 1043456
        %v969 = vsel %vm967, %v943, 0
        %v972 = vsel %vm967, %v944, 0
        %v975 = vsel %vm967, %v945, 0
        %v978 = vsel %vm967, %v946, 0
        %980 = vmatprep.subr.bf16.mxu0 0
        %981 = vmatpush1.bf16.msra.mxu0 0
        %982 = vmatprep.subr.bf16.mxu0 0
        %983 = vmatpush1.bf16.msra.mxu0 0
        %984 = vmatprep.subr.bf16.mxu0 0
        %985 = vmatpush1.bf16.msra.mxu0 0
        %986 = vmatprep.subr.bf16.mxu0 %v972
        %987 = vmatpush1.bf16.msra.mxu0 %v969
        %988 = vmatprep.subr.bf16.mxu0 %v940
        %989 = vmatpush1.bf16.msra.mxu0 %v939
        %990 = vmatprep.subr.bf16.mxu0 %v936
        %991 = vmatpush1.bf16.msra.mxu0 %v935
        %992 = vmatprep.subr.bf16.mxu0 %v932
        %993 = vmatpush1.bf16.msra.mxu0 %v931
        %994 = vmatprep.subr.bf16.mxu0 %v928
        %995 = vmatpush1.bf16.msra.mxu0 %v927
        %996 = vmatprep.subr.bf16.mxu0 0
        %997 = vmatpush2.bf16.msra.mxu0 0
        %998 = vmatprep.subr.bf16.mxu0 0
        %999 = vmatpush2.bf16.msra.mxu0 0
        %1000 = vmatprep.subr.bf16.mxu0 0
        %1001 = vmatpush2.bf16.msra.mxu0 0
        %1002 = vmatprep.subr.bf16.mxu0 0
        %1003 = vmatpush2.bf16.msra.mxu0 0
        %1004 = vmatprep.subr.bf16.mxu0 0
        %1005 = vmatpush2.bf16.msra.mxu0 0
        %1006 = vmatprep.subr.bf16.mxu0 0
        %1007 = vmatpush2.bf16.msra.mxu0 0
        %1008 = vmatprep.subr.bf16.mxu0 0
        %1009 = vmatpush2.bf16.msra.mxu0 0
        %1010 = vmatprep.subr.bf16.mxu0 0
        %1011 = vmatpush2.bf16.msra.mxu0 0
        %1012 = vmatprep.mubr.bf16.mxu0 0
        %1013 = vmatmul.mubr.bf16.gmra.mxu0 %v965
        %v1014 = vpop.f32.mrf.mxu0
        %v1015 = vadd.f32 %v871, %v1014
        %v1016 = vpop.f32.mrf.mxu0
        %v1017 = vadd.f32 %v871, %v1016
        %v1018 = vpop.f32.mrf.mxu0
        %v1019 = vpop.f32.mrf.mxu0
        %1020 = vdwg.mxu0
        %1021 = vmatprep.subr.bf16.mxu0 0
        %1022 = vmatpush1.bf16.msra.mxu0 0
        %1023 = vmatprep.subr.bf16.mxu0 0
        %1024 = vmatpush1.bf16.msra.mxu0 0
        %1025 = vmatprep.subr.bf16.mxu0 0
        %1026 = vmatpush1.bf16.msra.mxu0 0
        %1027 = vmatprep.subr.bf16.mxu0 %v978
        %1028 = vmatpush1.bf16.msra.mxu0 %v975
        %1029 = vmatprep.subr.bf16.mxu0 %v942
        %1030 = vmatpush1.bf16.msra.mxu0 %v941
        %1031 = vmatprep.subr.bf16.mxu0 %v938
        %1032 = vmatpush1.bf16.msra.mxu0 %v937
        %1033 = vmatprep.subr.bf16.mxu0 %v934
        %1034 = vmatpush1.bf16.msra.mxu0 %v933
        %1035 = vmatprep.subr.bf16.mxu0 %v930
        %1036 = vmatpush1.bf16.msra.mxu0 %v929
        %1037 = vmatprep.subr.bf16.mxu0 0
        %1038 = vmatpush2.bf16.msra.mxu0 0
        %1039 = vmatprep.subr.bf16.mxu0 0
        %1040 = vmatpush2.bf16.msra.mxu0 0
        %1041 = vmatprep.subr.bf16.mxu0 0
        %1042 = vmatpush2.bf16.msra.mxu0 0
        %1043 = vmatprep.subr.bf16.mxu0 0
        %1044 = vmatpush2.bf16.msra.mxu0 0
        %1045 = vmatprep.subr.bf16.mxu0 0
        %1046 = vmatpush2.bf16.msra.mxu0 0
        %1047 = vmatprep.subr.bf16.mxu0 0
        %1048 = vmatpush2.bf16.msra.mxu0 0
        %1049 = vmatprep.subr.bf16.mxu0 0
        %1050 = vmatpush2.bf16.msra.mxu0 0
        %1051 = vmatprep.subr.bf16.mxu0 0
        %1052 = vmatpush2.bf16.msra.mxu0 0
        %1053 = vmatprep.mubr.bf16.mxu0 0
        %1054 = vmatmul.mubr.bf16.gmra.mxu0 %v965
        %v1055 = vpop.f32.mrf.mxu0
        %v1056 = vadd.f32 %v871, %v1055
        %v1057 = vpop.f32.mrf.mxu0
        %v1058 = vadd.f32 %v871, %v1057
        %v1059 = vpop.f32.mrf.mxu0
        %v1060 = vpop.f32.mrf.mxu0
        %1061 = vdwg.mxu0
        %v1062 = vmax.f32 %v1015, 0.0
        %v1063 = vmax.f32 %v1017, 0.0
        %v1064 = vmax.f32 %v1056, 0.0
        %v1065 = vmax.f32 %v1058, 0.0
        %v1066 = vpack.c.bf16 %v1062, %v1062
        %v1067 = vpack.c.bf16 %v1063, %v1063
        %v1068 = vpack.c.bf16 %v1064, %v1064
        %v1069 = vpack.c.bf16 %v1065, %v1065
        %1070 = vst [vmem:[#allocation4] sm:$0xf] 0
        %1071 = vst [vmem:[#allocation4 + $0x10] sm:$0xf] 0
        %1072 = vst [vmem:[#allocation4 + $0xc] sm:$0xf] 0
        %1073 = vst [vmem:[#allocation4 + $0x1c] sm:$0xf] 0
        %v1076 = vunpack.c.l.b16 %v1066
        %v1077 = vunpack.c.l.b16 %v1067
        %v1078 = vpack.c.b16 %v1077, %v1076
        %1080 = vst [vmem:[#allocation4 + $0x4] sm:$0xff] %v1078
        %v1083 = vunpack.c.l.b16 %v1068
        %v1084 = vunpack.c.l.b16 %v1069
        %v1085 = vpack.c.b16 %v1084, %v1083
        %1087 = vst [vmem:[#allocation4 + $0x14] sm:$0xff] %v1085
        %v1088 = vld [vmem:[#allocation4 + $0x4] sm:$0xff]
        %v1089 = vld [vmem:[#allocation4 + $0x14] sm:$0xff]
        %1090 = vst [vmem:[%s418] sm:$0xff] %v1088
        %1091 = vst [vmem:[%s418 + $0x8] sm:$0xff] %v1089
        %v1092 = vld [vmem:[#allocation4] sm:$0xff]
        %v1093 = vld [vmem:[#allocation4 + $0x8] sm:$0xff]
        %v1094 = vld [vmem:[#allocation4 + $0x10] sm:$0xff]
        %v1095 = vld [vmem:[#allocation4 + $0x18] sm:$0xff]
        %vm1096 = vcmp.ne.s16.totalorder %v527, 0
        %v1097 = vsel %vm534, %v1092, 0
        %v1098 = vsel %vm1096, %v1093, 0
        %v1099 = vsel %vm534, %v1094, 0
        %v1100 = vsel %vm1096, %v1095, 0
        %1105 = vrot.lane.b32.xlu0 %v1097, 17
        %v1106 = vpop.permute.xlu0 %1105
        %1107 = vrot.lane.b32.xlu0 %v1098, 17
        %v1108 = vpop.permute.xlu0 %1107
        %1109 = vrot.lane.b32.xlu0 %v1099, 17
        %v1110 = vpop.permute.xlu0 %1109
        %1111 = vrot.lane.b32.xlu0 %v1100, 17
        %v1112 = vpop.permute.xlu0 %1111
        %v1113 = vrot.slane %v1106, 4
        %v1114 = vrot.slane %v1108, 4
        %v1115 = vrot.slane %v1110, 4
        %v1116 = vrot.slane %v1112, 4
        %v1117 = vsel %vm531, %v1113, %v1114
        %v1118 = vsel %vm553, %v1106, %v1117
        %v1119 = vsel %vm531, %v1115, %v1116
        %v1120 = vsel %vm553, %v1110, %v1119
        %1123 = vst [vmem:[#allocation5] sm:$0xff] %v1118
        %1124 = vst [vmem:[#allocation5 + $0x8] sm:$0xff] %v1120
        %vm1125 = vcmp.ne.s16.totalorder %v577, 0
        %v1126 = vsel %vm583, %v1092, 0
        %v1127 = vsel %vm1125, %v1093, 0
        %v1128 = vsel %vm583, %v1094, 0
        %v1129 = vsel %vm1125, %v1095, 0
        %1134 = vrot.lane.b32.xlu0 %v1126, 16
        %v1135 = vpop.permute.xlu0 %1134
        %1136 = vrot.lane.b32.xlu0 %v1127, 16
        %v1137 = vpop.permute.xlu0 %1136
        %1138 = vrot.lane.b32.xlu0 %v1128, 16
        %v1139 = vpop.permute.xlu0 %1138
        %1140 = vrot.lane.b32.xlu0 %v1129, 16
        %v1141 = vpop.permute.xlu0 %1140
        %v1142 = vrot.slane %v1135, 4
        %v1143 = vrot.slane %v1137, 4
        %v1144 = vrot.slane %v1139, 4
        %v1145 = vrot.slane %v1141, 4
        %v1146 = vsel %vm531, %v1142, %v1143
        %v1147 = vsel %vm602, %v1135, %v1146
        %v1148 = vsel %vm531, %v1144, %v1145
        %v1149 = vsel %vm602, %v1139, %v1148
        %1152 = vst [vmem:[#allocation5 + $0x10] sm:$0xff] %v1147
        %1153 = vst [vmem:[#allocation5 + $0x18] sm:$0xff] %v1149
        %vm1154 = vcmp.ne.s16.totalorder %v630, 0
        %v1155 = vsel %vm636, %v1092, 0
        %v1156 = vsel %vm1154, %v1093, 0
        %v1157 = vsel %vm636, %v1094, 0
        %v1158 = vsel %vm1154, %v1095, 0
        %1163 = vrot.lane.b32.xlu0 %v1155, 15
        %v1164 = vpop.permute.xlu0 %1163
        %1165 = vrot.lane.b32.xlu0 %v1156, 15
        %v1166 = vpop.permute.xlu0 %1165
        %1167 = vrot.lane.b32.xlu0 %v1157, 15
        %v1168 = vpop.permute.xlu0 %1167
        %1169 = vrot.lane.b32.xlu0 %v1158, 15
        %v1170 = vpop.permute.xlu0 %1169
        %v1171 = vrot.slane %v1164, 4
        %v1172 = vrot.slane %v1166, 4
        %v1173 = vrot.slane %v1168, 4
        %v1174 = vrot.slane %v1170, 4
        %v1175 = vsel %vm531, %v1171, %v1172
        %v1176 = vsel %vm655, %v1164, %v1175
        %v1177 = vsel %vm531, %v1173, %v1174
        %v1178 = vsel %vm655, %v1168, %v1177
        %1181 = vst [vmem:[#allocation5 + $0x20] sm:$0xff] %v1176
        %1182 = vst [vmem:[#allocation5 + $0x28] sm:$0xff] %v1178
        %vm1183 = vcmp.ne.s16.totalorder %v679, 0
        %v1184 = vsel %vm685, %v1092, 0
        %v1185 = vsel %vm1183, %v1093, 0
        %v1186 = vsel %vm685, %v1094, 0
        %v1187 = vsel %vm1183, %v1095, 0
        %1192 = vrot.lane.b32.xlu0 %v1184, 1
        %v1193 = vpop.permute.xlu0 %1192
        %1194 = vrot.lane.b32.xlu0 %v1185, 1
        %v1195 = vpop.permute.xlu0 %1194
        %1196 = vrot.lane.b32.xlu0 %v1186, 1
        %v1197 = vpop.permute.xlu0 %1196
        %1198 = vrot.lane.b32.xlu0 %v1187, 1
        %v1199 = vpop.permute.xlu0 %1198
        %v1200 = vrot.slane %v1193, 4
        %v1201 = vrot.slane %v1195, 4
        %v1202 = vrot.slane %v1197, 4
        %v1203 = vrot.slane %v1199, 4
        %v1204 = vsel %vm531, %v1200, %v1201
        %v1205 = vsel %vm704, %v1193, %v1204
        %v1206 = vsel %vm531, %v1202, %v1203
        %v1207 = vsel %vm704, %v1197, %v1206
        %1210 = vst [vmem:[#allocation5 + $0x30] sm:$0xff] %v1205
        %1211 = vst [vmem:[#allocation5 + $0x38] sm:$0xff] %v1207
        %v1216 = vrot.slane %v1092, 4
        %v1217 = vrot.slane %v1093, 4
        %v1218 = vrot.slane %v1094, 4
        %v1219 = vrot.slane %v1095, 4
        %v1220 = vsel %vm531, %v1216, %v1217
        %v1221 = vsel %vm531, %v1218, %v1219
        %1224 = vst [vmem:[#allocation5 + $0x40] sm:$0xff] %v1220
        %1225 = vst [vmem:[#allocation5 + $0x48] sm:$0xff] %v1221
        %1226 = vrot.lane.b32.xlu0 %v1092, 127
        %v1227 = vpop.permute.xlu0 %1226
        %1228 = vrot.lane.b32.xlu0 %v1093, 127
        %v1229 = vpop.permute.xlu0 %1228
        %1230 = vrot.lane.b32.xlu0 %v1094, 127
        %v1231 = vpop.permute.xlu0 %1230
        %1232 = vrot.lane.b32.xlu0 %v1095, 127
        %v1233 = vpop.permute.xlu0 %1232
        %v1234 = vrot.slane %v1227, 4
        %v1235 = vrot.slane %v1229, 4
        %v1236 = vrot.slane %v1231, 4
        %v1237 = vrot.slane %v1233, 4
        %v1238 = vsel %vm531, %v1234, %v1235
        %v1239 = vsel %vm681, %v1238, %v1229
        %v1240 = vsel %vm531, %v1236, %v1237
        %v1241 = vsel %vm681, %v1240, %v1233
        %v1244 = vsel %vm732, %v1239, 0
        %v1245 = vsel %vm732, %v1241, 0
        %1246 = vst [vmem:[#allocation5 + $0x50] sm:$0xff] %v1244
        %1247 = vst [vmem:[#allocation5 + $0x58] sm:$0xff] %v1245
        %1248 = vrot.lane.b32.xlu0 %v1092, 113
        %v1249 = vpop.permute.xlu0 %1248
        %1250 = vrot.lane.b32.xlu0 %v1093, 113
        %v1251 = vpop.permute.xlu0 %1250
        %1252 = vrot.lane.b32.xlu0 %v1094, 113
        %v1253 = vpop.permute.xlu0 %1252
        %1254 = vrot.lane.b32.xlu0 %v1095, 113
        %v1255 = vpop.permute.xlu0 %1254
        %v1256 = vrot.slane %v1249, 4
        %v1257 = vrot.slane %v1251, 4
        %v1258 = vrot.slane %v1253, 4
        %v1259 = vrot.slane %v1255, 4
        %v1260 = vsel %vm531, %v1256, %v1257
        %v1261 = vsel %vm632, %v1260, %v1251
        %v1262 = vsel %vm531, %v1258, %v1259
        %v1263 = vsel %vm632, %v1262, %v1255
        %v1266 = vsel %vm765, %v1261, 0
        %v1267 = vsel %vm765, %v1263, 0
        %1268 = vst [vmem:[#allocation5 + $0x60] sm:$0xff] %v1266
        %1269 = vst [vmem:[#allocation5 + $0x68] sm:$0xff] %v1267
        %1270 = vrot.lane.b32.xlu0 %v1092, 112
        %v1271 = vpop.permute.xlu0 %1270
        %1272 = vrot.lane.b32.xlu0 %v1093, 112
        %v1273 = vpop.permute.xlu0 %1272
        %1274 = vrot.lane.b32.xlu0 %v1094, 112
        %v1275 = vpop.permute.xlu0 %1274
        %1276 = vrot.lane.b32.xlu0 %v1095, 112
        %v1277 = vpop.permute.xlu0 %1276
        %v1278 = vrot.slane %v1271, 4
        %v1279 = vrot.slane %v1273, 4
        %v1280 = vrot.slane %v1275, 4
        %v1281 = vrot.slane %v1277, 4
        %v1282 = vsel %vm531, %v1278, %v1279
        %v1283 = vsel %vm579, %v1282, %v1273
        %v1284 = vsel %vm531, %v1280, %v1281
        %v1285 = vsel %vm579, %v1284, %v1277
        %v1288 = vsel %vm794, %v1283, 0
        %v1289 = vsel %vm794, %v1285, 0
        %1290 = vst [vmem:[#allocation5 + $0x70] sm:$0xff] %v1288
        %1291 = vst [vmem:[#allocation5 + $0x78] sm:$0xff] %v1289
        %1292 = vrot.lane.b32.xlu0 %v1092, 111
        %v1293 = vpop.permute.xlu0 %1292
        %1294 = vrot.lane.b32.xlu0 %v1093, 111
        %v1295 = vpop.permute.xlu0 %1294
        %1296 = vrot.lane.b32.xlu0 %v1094, 111
        %v1297 = vpop.permute.xlu0 %1296
        %1298 = vrot.lane.b32.xlu0 %v1095, 111
        %v1299 = vpop.permute.xlu0 %1298
        %v1300 = vrot.slane %v1293, 4
        %v1301 = vrot.slane %v1295, 4
        %v1302 = vrot.slane %v1297, 4
        %v1303 = vrot.slane %v1299, 4
        %v1304 = vsel %vm531, %v1300, %v1301
        %v1305 = vsel %vm529, %v1304, %v1295
        %v1306 = vsel %vm531, %v1302, %v1303
        %v1307 = vsel %vm529, %v1306, %v1299
        %v1310 = vsel %vm827, %v1305, 0
        %v1311 = vsel %vm827, %v1307, 0
        %1312 = vst [vmem:[#allocation5 + $0x80] sm:$0xff] %v1310
        %1313 = vst [vmem:[#allocation5 + $0x88] sm:$0xff] %v1311
        %v1314 = vld [vmem:[%s4] sm:$0xff]
        %v1315 = vld [vmem:[%s4 + $0x8] sm:$0xff]
        %v1316 = vld [vmem:[#allocation5] sm:$0xff]
        %v1317 = vld [vmem:[#allocation5 + $0x8] sm:$0xff]
        %v1318 = vld [vmem:[#allocation5 + $0x10] sm:$0xff]
        %v1319 = vld [vmem:[#allocation5 + $0x18] sm:$0xff]
        %v1320 = vld [vmem:[#allocation5 + $0x20] sm:$0xff]
        %v1321 = vld [vmem:[#allocation5 + $0x28] sm:$0xff]
        %v1322 = vld [vmem:[#allocation5 + $0x30] sm:$0xff]
        %v1323 = vld [vmem:[#allocation5 + $0x38] sm:$0xff]
        %v1324 = vld [vmem:[#allocation5 + $0x40] sm:$0xff]
        %v1325 = vld [vmem:[#allocation5 + $0x48] sm:$0xff]
        %v1326 = vld [vmem:[#allocation5 + $0x50] sm:$0xff]
        %v1327 = vld [vmem:[#allocation5 + $0x58] sm:$0xff]
        %v1328 = vld [vmem:[#allocation5 + $0x60] sm:$0xff]
        %v1329 = vld [vmem:[#allocation5 + $0x68] sm:$0xff]
        %v1330 = vld [vmem:[#allocation5 + $0x70] sm:$0xff]
        %v1331 = vld [vmem:[#allocation5 + $0x78] sm:$0xff]
        %v1332 = vld [vmem:[#allocation5 + $0x80] sm:$0xff]
        %v1333 = vld [vmem:[#allocation5 + $0x88] sm:$0xff]
        %v1334 = vld [vmem:[%s5] sm:$0xff]
        %v1335 = vld [vmem:[%s5 + $0x8] sm:$0xff]
        %1337 = vset.pattern.permute.xlu0 0
        %1338 = vperm.xlu0 %1337, %v1334
        %v1339 = vpop.permute.xlu0 %1338
        %1342 = vset.pattern.permute.xlu0 0
        %1343 = vperm.xlu0 %1342, %v1335
        %v1344 = vpop.permute.xlu0 %1343
        %v1348 = vunpack.c.l.b16 %v1314
        %v1349 = vunpack.c.h.b16 %v1314
        %v1350 = vunpack.c.l.b16 %v1315
        %v1351 = vunpack.c.h.b16 %v1315
        %v1352 = vpack.c.b16 %v1350, %v1348
        %v1353 = vpack.c.b16 %v1351, %v1349
        %v1373 = vunpack.c.l.b16 %v1316
        %v1374 = vunpack.c.h.b16 %v1316
        %v1375 = vunpack.c.l.b16 %v1317
        %v1376 = vunpack.c.h.b16 %v1317
        %v1377 = vunpack.c.l.b16 %v1318
        %v1378 = vunpack.c.h.b16 %v1318
        %v1379 = vunpack.c.l.b16 %v1319
        %v1380 = vunpack.c.h.b16 %v1319
        %v1381 = vunpack.c.l.b16 %v1320
        %v1382 = vunpack.c.h.b16 %v1320
        %v1383 = vunpack.c.l.b16 %v1321
        %v1384 = vunpack.c.h.b16 %v1321
        %v1385 = vunpack.c.l.b16 %v1322
        %v1386 = vunpack.c.h.b16 %v1322
        %v1387 = vunpack.c.l.b16 %v1323
        %v1388 = vunpack.c.h.b16 %v1323
        %v1389 = vunpack.c.l.b16 %v1324
        %v1390 = vunpack.c.h.b16 %v1324
        %v1391 = vunpack.c.l.b16 %v1325
        %v1392 = vunpack.c.h.b16 %v1325
        %v1393 = vunpack.c.l.b16 %v1326
        %v1394 = vunpack.c.h.b16 %v1326
        %v1395 = vunpack.c.l.b16 %v1327
        %v1396 = vunpack.c.h.b16 %v1327
        %v1397 = vunpack.c.l.b16 %v1328
        %v1398 = vunpack.c.h.b16 %v1328
        %v1399 = vunpack.c.l.b16 %v1329
        %v1400 = vunpack.c.h.b16 %v1329
        %v1401 = vunpack.c.l.b16 %v1330
        %v1402 = vunpack.c.h.b16 %v1330
        %v1403 = vunpack.c.l.b16 %v1331
        %v1404 = vunpack.c.h.b16 %v1331
        %v1405 = vunpack.c.l.b16 %v1332
        %v1406 = vunpack.c.h.b16 %v1332
        %v1407 = vunpack.c.l.b16 %v1333
        %v1408 = vunpack.c.h.b16 %v1333
        %v1409 = vpack.c.b16 %v1375, %v1373
        %v1410 = vpack.c.b16 %v1376, %v1374
        %v1411 = vpack.c.b16 %v1379, %v1377
        %v1412 = vpack.c.b16 %v1380, %v1378
        %v1413 = vpack.c.b16 %v1383, %v1381
        %v1414 = vpack.c.b16 %v1384, %v1382
        %v1415 = vpack.c.b16 %v1387, %v1385
        %v1416 = vpack.c.b16 %v1388, %v1386
        %v1417 = vpack.c.b16 %v1391, %v1389
        %v1418 = vpack.c.b16 %v1392, %v1390
        %v1419 = vpack.c.b16 %v1395, %v1393
        %v1420 = vpack.c.b16 %v1396, %v1394
        %v1421 = vpack.c.b16 %v1399, %v1397
        %v1422 = vpack.c.b16 %v1400, %v1398
        %v1423 = vpack.c.b16 %v1403, %v1401
        %v1424 = vpack.c.b16 %v1404, %v1402
        %v1425 = vpack.c.b16 %v1407, %v1405
        %v1426 = vpack.c.b16 %v1408, %v1406
        %vm1445 = vcmask 130048
        %v1447 = vsel %vm1445, %v1353, 0
        %1449 = vmatprep.subr.bf16.mxu0 %v1424
        %1450 = vmatpush1.bf16.msra.mxu0 %v1423
        %1451 = vmatprep.subr.bf16.mxu0 %v1422
        %1452 = vmatpush1.bf16.msra.mxu0 %v1421
        %1453 = vmatprep.subr.bf16.mxu0 %v1420
        %1454 = vmatpush1.bf16.msra.mxu0 %v1419
        %1455 = vmatprep.subr.bf16.mxu0 %v1418
        %1456 = vmatpush1.bf16.msra.mxu0 %v1417
        %1457 = vmatprep.subr.bf16.mxu0 %v1416
        %1458 = vmatpush1.bf16.msra.mxu0 %v1415
        %1459 = vmatprep.subr.bf16.mxu0 %v1414
        %1460 = vmatpush1.bf16.msra.mxu0 %v1413
        %1461 = vmatprep.subr.bf16.mxu0 %v1412
        %1462 = vmatpush1.bf16.msra.mxu0 %v1411
        %1463 = vmatprep.subr.bf16.mxu0 %v1410
        %1464 = vmatpush1.bf16.msra.mxu0 %v1409
        %1465 = vmatprep.subr.bf16.mxu0 0
        %1466 = vmatpush2.bf16.msra.mxu0 0
        %1467 = vmatprep.subr.bf16.mxu0 0
        %1468 = vmatpush2.bf16.msra.mxu0 0
        %1469 = vmatprep.subr.bf16.mxu0 0
        %1470 = vmatpush2.bf16.msra.mxu0 0
        %1471 = vmatprep.subr.bf16.mxu0 0
        %1472 = vmatpush2.bf16.msra.mxu0 0
        %1473 = vmatprep.subr.bf16.mxu0 0
        %1474 = vmatpush2.bf16.msra.mxu0 0
        %1475 = vmatprep.subr.bf16.mxu0 0
        %1476 = vmatpush2.bf16.msra.mxu0 0
        %1477 = vmatprep.subr.bf16.mxu0 0
        %1478 = vmatpush2.bf16.msra.mxu0 0
        %1479 = vmatprep.subr.bf16.mxu0 %v1426
        %1480 = vmatpush2.bf16.msra.mxu0 %v1425
        %1481 = vmatprep.mubr.bf16.mxu0 %v1447
        %1482 = vmatmul.mubr.bf16.gmra.mxu0 %v1352
        %v1483 = vpop.f32.mrf.mxu0
        %v1484 = vadd.f32 %v1339, %v1483
        %v1485 = vpop.f32.mrf.mxu0
        %v1486 = vadd.f32 %v1339, %v1485
        %v1487 = vpop.f32.mrf.mxu0
        %v1488 = vadd.f32 %v1344, %v1487
        %v1489 = vpop.f32.mrf.mxu0
        %v1490 = vadd.f32 %v1344, %v1489
        %1491 = vdwg.mxu0
        %v1492 = vmax.f32 %v1484, 0.0
        %v1493 = vmax.f32 %v1486, 0.0
        %v1494 = vmax.f32 %v1488, 0.0
        %v1495 = vmax.f32 %v1490, 0.0
        %v1496 = vld [vmem:[#allocation11] sm:$0xf]
        %v1497 = vld [vmem:[#allocation11 + $0x4] sm:$0xf]
        %v1498 = vpack.c.bf16 %v1494, %v1492
        %v1499 = vpack.c.bf16 %v1495, %v1493
        %v1500 = vld [vmem:[%s7] sm:$0xff]
        %v1501 = vld [vmem:[%s7 + $0x8] sm:$0x7f]
        %1503 = vset.pattern.permute.xlu0 0
        %1504 = vperm.xlu0 %1503, %v1500
        %v1505 = vpop.permute.xlu0 %1504
        %1508 = vset.pattern.permute.xlu0 0
        %1509 = vperm.xlu0 %1508, %v1501
        %v1510 = vpop.permute.xlu0 %1509
        %v1514 = vunpack.c.l.b16 %v1496
        %v1515 = vunpack.c.l.b16 %v1497
        %v1516 = vpack.c.b16 %v1515, %v1514
        %v1518 = vsel %vm1445, %v1516, 0
        %1520 = vmatprep.subr.bf16.mxu0 0
        %1521 = vmatpush1.bf16.msra.mxu0 0
        %1522 = vmatprep.subr.bf16.mxu0 0
        %1523 = vmatpush1.bf16.msra.mxu0 0
        %1524 = vmatprep.subr.bf16.mxu0 0
        %1525 = vmatpush1.bf16.msra.mxu0 0
        %1526 = vmatprep.subr.bf16.mxu0 0
        %1527 = vmatpush1.bf16.msra.mxu0 0
        %1528 = vmatprep.subr.bf16.mxu0 0
        %1529 = vmatpush1.bf16.msra.mxu0 0
        %1530 = vmatprep.subr.bf16.mxu0 0
        %1531 = vmatpush1.bf16.msra.mxu0 0
        %1532 = vmatprep.subr.bf16.mxu0 0
        %1533 = vmatpush1.bf16.msra.mxu0 0
        %1534 = vmatprep.subr.bf16.mxu0 %v1499
        %1535 = vmatpush1.bf16.msra.mxu0 %v1498
        %1536 = vmatprep.subr.bf16.mxu0 0
        %1537 = vmatpush2.bf16.msra.mxu0 0
        %1538 = vmatprep.subr.bf16.mxu0 0
        %1539 = vmatpush2.bf16.msra.mxu0 0
        %1540 = vmatprep.subr.bf16.mxu0 0
        %1541 = vmatpush2.bf16.msra.mxu0 0
        %1542 = vmatprep.subr.bf16.mxu0 0
        %1543 = vmatpush2.bf16.msra.mxu0 0
        %1544 = vmatprep.subr.bf16.mxu0 0
        %1545 = vmatpush2.bf16.msra.mxu0 0
        %1546 = vmatprep.subr.bf16.mxu0 0
        %1547 = vmatpush2.bf16.msra.mxu0 0
        %1548 = vmatprep.subr.bf16.mxu0 0
        %1549 = vmatpush2.bf16.msra.mxu0 0
        %1550 = vmatprep.subr.bf16.mxu0 0
        %1551 = vmatpush2.bf16.msra.mxu0 0
        %1552 = vmatprep.mubr.bf16.mxu0 0
        %1553 = vmatmul.mubr.bf16.gmra.mxu0 %v1518
        %v1554 = vpop.f32.mrf.mxu0
        %v1555 = vadd.f32 %v1505, %v1554
        %v1556 = vpop.f32.mrf.mxu0
        %v1557 = vadd.f32 %v1505, %v1556
        %v1558 = vpop.f32.mrf.mxu0
        %v1559 = vadd.f32 %v1510, %v1558
        %v1560 = vpop.f32.mrf.mxu0
        %v1561 = vadd.f32 %v1510, %v1560
        %1562 = vdwg.mxu0
        %v1565 = vcombine.low %v1555, %v1557
        %1567 = vst [vmem:[%s442] sm:$0x77] %v1565
        %vm1570 = vcmask 1044480
        %v1571 = vrot.slane %v1555, 3
        %v1572 = vrot.slane %v1559, 3
        %v1573 = vsel %vm1570, %v1571, %v1572
        %v1574 = vrot.slane %v1557, 3
        %v1575 = vrot.slane %v1561, 3
        %v1576 = vsel %vm1570, %v1574, %v1575
        %1581 = vst [vmem:[%s447] sm:$0xff] %v1573
        %1582 = vst [vmem:[%s447 + $0x8] sm:$0xff] %v1576
        %1583 = vst [vmem:[%s447 + $0x10] sm:$0xf] %v1572
        %1584 = vst [vmem:[%s447 + $0x18] sm:$0xf] %v1575
        %s1585 = sand.u32 %s215, 1
        %s1586 = scalar_lea.sflag [#allocation8], %s1585
        %s1587 = sand.u32 %s215, 1
        %s1588 = smul.addr %s1587, 16
        %s1589 = scalar_lea.vmem [#allocation12], %s1588
        %p1590 = scmp.lt.s32.totalorder %s29, 1
        %s1591 = scalar_select %p1590, %s29, 1
        %s1592 = smul.addr %s1591, 2
        %s1593 = smul.addr %s1592, 4
        %s1594 = scalar_lea.vmem %s9, %s1593
        %p1595 = scmp.lt.s32.totalorder %s29, 1
        %s1596 = scalar_select %p1595, %s29, 1
        %s1597 = smul.addr %s1596, 4
        %s1598 = smul.addr %s1597, 8
        %s1599 = scalar_lea.vmem %s10, %s1598
        // Predicated region
        $region65: #{tpu_custom_call.1} parent=51 // pred_check
          %p1600 = pneg %p225
        $region66: #{tpu_custom_call.1} parent=51 // pred_check_branch
          %1602 = sbr.rel (%p1600) target = $region68
        $region67: #{tpu_custom_call.1} parent=51 // pred_region
          %s1604 = ssub.s32 256, 256
          %1605 = vsyncadd %s1586, %s1604
          %s1606 = smul.addr %s29, 4
          %s1607 = smul.addr %s1606, 64
          %s1608 = scalar_lea.hbm %s8, %s1607
          %s1609 = sshll.u32 %s1589, 4
          %s1610 = int_to_ptr.vmem [resolvable:$true] %s1609
          %1615 = dma.vmem_to_hbm [thread:$0]  %s1610, 256, %s1608, %s1586, 128, 128, 8
        $region68: #{tpu_custom_call.1} parent=51 // pred_fallthru
          _
        // Predicated region
        $region69: #{tpu_custom_call.1} parent=51 // pred_check
          %p1616 = pneg %p251
        $region70: #{tpu_custom_call.1} parent=51 // pred_check_branch
          %1618 = sbr.rel (%p1616) target = $region72
        $region71: #{tpu_custom_call.1} parent=51 // pred_region
          _
        $region72: #{tpu_custom_call.1} parent=51 // pred_fallthru
          _
        // Predicated region
        $region73: #{tpu_custom_call.1} parent=51 // pred_check
          %p1619 = pneg %p277
        $region74: #{tpu_custom_call.1} parent=51 // pred_check_branch
          %1621 = sbr.rel (%p1619) target = $region76
        $region75: #{tpu_custom_call.1} parent=51 // pred_region
          _
        $region76: #{tpu_custom_call.1} parent=51 // pred_fallthru
          _
      $region52: #{tpu_custom_call.1} parent=5 // pred_fallthru
        _
      %p1622 = scmp.le.s32.totalorder 2, %s24
      // Predicated region
      $region77: #{tpu_custom_call.1} parent=5 // pred_check
        %p1623 = pneg %p1622
      $region78: #{tpu_custom_call.1} parent=5 // pred_check_branch
        %1625 = sbr.rel (%p1623) target = $region80
      $region79: #{tpu_custom_call.1} parent=5 // pred_region
        %s1626 = ssub.s32 %s24, 2
        // Predicated region
        $region81: #{tpu_custom_call.1} parent=79 // pred_check
          %p1627 = pneg %p231
        $region82: #{tpu_custom_call.1} parent=79 // pred_check_branch
          %1629 = sbr.rel (%p1627) target = $region84
        $region83: #{tpu_custom_call.1} parent=79 // pred_region
          %s1630 = sand.u32 %s216, 1
          %s1631 = scalar_lea.sflag [#allocation8], %s1630
          %s1632 = sand.u32 %s216, 1
          %s1633 = smul.addr %s1632, 16
          %s1634 = scalar_lea.vmem [#allocation12], %s1633
          %1635 = dma.done %s1631, 256
        $region84: #{tpu_custom_call.1} parent=79 // pred_fallthru
          _
        // Predicated region
        $region85: #{tpu_custom_call.1} parent=79 // pred_check
          %p1636 = pneg %p257
        $region86: #{tpu_custom_call.1} parent=79 // pred_check_branch
          %1638 = sbr.rel (%p1636) target = $region88
        $region87: #{tpu_custom_call.1} parent=79 // pred_region
          %p1639 = scmp.lt.s32.totalorder %s30, 1
          %s1640 = scalar_select %p1639, %s30, 1
          %s1641 = smul.addr %s1640, 2
          %s1642 = smul.addr %s1641, 4
          %s1643 = scalar_lea.vmem %s9, %s1642
        $region88: #{tpu_custom_call.1} parent=79 // pred_fallthru
          _
        // Predicated region
        $region89: #{tpu_custom_call.1} parent=79 // pred_check
          %p1644 = pneg %p283
        $region90: #{tpu_custom_call.1} parent=79 // pred_check_branch
          %1646 = sbr.rel (%p1644) target = $region92
        $region91: #{tpu_custom_call.1} parent=79 // pred_region
          %p1647 = scmp.lt.s32.totalorder %s30, 1
          %s1648 = scalar_select %p1647, %s30, 1
          %s1649 = smul.addr %s1648, 4
          %s1650 = smul.addr %s1649, 8
          %s1651 = scalar_lea.vmem %s10, %s1650
        $region92: #{tpu_custom_call.1} parent=79 // pred_fallthru
          _
      $region80: #{tpu_custom_call.1} parent=5 // pred_fallthru
        _
    $region6: #{tpu_custom_call.1} parent=1 // loop_footer
      %s28 = sadd.s32 1, %s24
    $region7: #{tpu_custom_call.1} parent=1 // loop_footer_branch
      %23 = sbr.rel target = $region3
    $region8: #{tpu_custom_call.1} parent=1 // loop_exit
      _
    %1652 = vsyncpa [#allocation7], 1
    %s1653 = scalar_lea.sflag [#allocation7], 1
    %1654 = vsyncpa %s1653, 1
    %1655 = vsyncpa [#allocation10], 1
    %1656 = vsyncpa [#allocation8], 1
    %s1657 = scalar_lea.sflag [#allocation8], 1
    %1658 = vsyncpa %s1657, 1

</llo_original>
